<compile_context>
chip_gen: v7x
topology: tpu7x:2x2x1
jax: 0.10.0
libtpu: 0.0.40
codegen_flags: <defaults>
</compile_context>

<pallas_src>
import numpy as np

import jax
import jax.numpy as jnp
from jax import lax
from jax.experimental import pallas as pl
from jax.experimental.pallas import tpu as pltpu

_LANE = 128  # pool-candidate group width (lane aligned)


# ----------------------------------------------------------------------------
# Pallas kernel: full ConvNet forward for one batch tile, weights resident.
# ----------------------------------------------------------------------------
def _convnet_kernel(x_ref, t1_ref, b1_ref, t2_ref, b2_ref, wfc_ref, bfc_ref,
                    out_ref):
    f32 = jnp.float32
    L = _LANE

    x = x_ref[...]                                                   # (TB, Cin*64)

    # bn1 (folded) + conv1 (Toeplitz, columns pre-grouped by pool candidate).
    y1 = jnp.dot(x, t1_ref[...].astype(f32),
                 preferred_element_type=f32) + b1_ref[...]           # (TB, 512)
    # 2x2/stride-2 max-pool == max over 4 lane-aligned candidate groups; ReLU.
    m1 = jnp.maximum(jnp.maximum(y1[:, 0:L], y1[:, L:2 * L]),
                     jnp.maximum(y1[:, 2 * L:3 * L], y1[:, 3 * L:4 * L]))
    a1 = jnp.maximum(m1, 0.0)                                        # (TB, 128)
    # Dropout(p=0.2): identity in eval mode.

    # bn2 (folded) + conv2 (Toeplitz, columns pre-grouped, zero-padded 64->128).
    y2 = jnp.dot(a1, t2_ref[...].astype(f32),
                 preferred_element_type=f32) + b2_ref[...]           # (TB, 512)
    m2 = jnp.maximum(jnp.maximum(y2[:, 0:L], y2[:, L:2 * L]),
                     jnp.maximum(y2[:, 2 * L:3 * L], y2[:, 3 * L:4 * L]))
    a2 = jnp.maximum(m2, 0.0)            # (TB, 128): cols 0..63 == x.view(-1,64), 64..127 = 0 pad
    # Dropout(p=0.2): identity in eval mode.

    # bnfc (folded) + fc1.
    out = jnp.dot(a2, wfc_ref[...].astype(f32),
                  preferred_element_type=f32) + bfc_ref[...]         # (TB, hidden_g)
    out_ref[...] = out.astype(out_ref.dtype)


def convnet_forward(x_nchw, kp, *, block_b=128):
    """x_nchw: (B, Cin, 8, 8) float32. Returns (B, hidden_g) float32."""
    B = x_nchw.shape[0]
    x_flat = x_nchw.reshape(B, -1).astype(jnp.float32)               # NCHW flatten
    feat = x_flat.shape[1]
    hidden_g = kp["wfc"].shape[1]
    tb = min(block_b, B)
    assert B % tb == 0

    def resident(shape):  # weights: constant block index -> stays in VMEM
        return pl.BlockSpec(shape, lambda b: (0, 0))

    return pl.pallas_call(
        _convnet_kernel,
        out_shape=jax.ShapeDtypeStruct((B, hidden_g), jnp.float32),
        grid=(B // tb,),
        in_specs=[
            pl.BlockSpec((tb, feat), lambda b: (b, 0)),
            resident(kp["t1"].shape), resident(kp["b1"].shape),
            resident(kp["t2"].shape), resident(kp["b2"].shape),
            resident(kp["wfc"].shape), resident(kp["bfc"].shape),
        ],
        out_specs=pl.BlockSpec((tb, hidden_g), lambda b: (b, 0)),
        compiler_params=pltpu.CompilerParams(
            dimension_semantics=("parallel",)),
    )(x_flat, kp["t1"], kp["b1"], kp["t2"], kp["b2"], kp["wfc"], kp["bfc"])


# ----------------------------------------------------------------------------
# One-time host-side parameter lowering (layout plumbing, not compute).
# ----------------------------------------------------------------------------
def _conv_toeplitz(w, H, W):
    """(Cout, Cin, 3, 3) conv weights -> dense (Cin*H*W, Cout*H*W) matrix,
    NCHW-flat on both sides, zero padding=1, stride=1."""
    wn = np.asarray(w, dtype=np.float32)
    Cout, Cin, KH, KW = wn.shape
    T = np.zeros((Cin * H * W, Cout * H * W), dtype=np.float32)
    for co in range(Cout):
        for ci in range(Cin):
            for ky in range(KH):
                for kx in range(KW):
                    for oh in range(H):
                        ih = oh + ky - 1
                        if not (0 <= ih < H):
                            continue
                        for ow in range(W):
                            iw = ow + kx - 1
                            if not (0 <= iw < W):
                                continue
                            T[ci * H * W + ih * W + iw,
                              co * H * W + oh * W + ow] = wn[co, ci, ky, kx]
    return T


def _pool_group_select(C, H, W, group_width):
    """0/1 matrix (C*H*W, 4*group_width): column k*group_width + p (with
    p = c*Ho*Wo + oh*Wo + ow) selects pre-pool position (c, 2oh+dy, 2ow+dx),
    (dy, dx) = divmod(k, 2).  Columns beyond C*Ho*Wo in each group stay zero
    (lane-alignment padding).  max over the four groups == 2x2 max pool."""
    Ho, Wo = H // 2, W // 2
    S = np.zeros((C * H * W, 4 * group_width), dtype=np.float32)
    for k in range(4):
        dy, dx = divmod(k, 2)
        for c in range(C):
            for oh in range(Ho):
                for ow in range(Wo):
                    S[c * H * W + (2 * oh + dy) * W + (2 * ow + dx),
                      k * group_width + c * Ho * Wo + oh * Wo + ow] = 1.0
    return S


def prepare_kernel_params(p):
    eps = 1e-5

    def fold(g, b, m, v):
        g, b, m, v = (np.asarray(a, np.float32) for a in (g, b, m, v))
        s = g / np.sqrt(v + eps)
        return s, b - m * s

    s1, o1 = fold(p["bn1_g"], p["bn1_b"], p["bn1_m"], p["bn1_v"])
    s2, o2 = fold(p["bn2_g"], p["bn2_b"], p["bn2_m"], p["bn2_v"])
    sfc, ofc = fold(p["bnfc_g"], p["bnfc_b"], p["bnfc_m"], p["bnfc_v"])

    # ---- layer 1: bn1 folded into conv1 Toeplitz; pool grouping folded in.
    T1 = _conv_toeplitz(p["w1"], 8, 8)                   # (Cin*64, 512)
    s1e, o1e = np.repeat(s1, 64), np.repeat(o1, 64)
    b1e = np.repeat(np.asarray(p["b1"], np.float32), 64)
    T1f = s1e[:, None] * T1
    c1 = o1e @ T1 + b1e
    S1 = _pool_group_select(8, 8, 8, _LANE)              # (512, 512) permutation
    t1, b1 = T1f @ S1, c1 @ S1

    # ---- layer 2: bn2 folded into conv2 Toeplitz; pool grouping (64->128 pad).
    T2 = _conv_toeplitz(p["w2"], 4, 4)                   # (128, 256)
    s2e, o2e = np.repeat(s2, 16), np.repeat(o2, 16)
    b2e = np.repeat(np.asarray(p["b2"], np.float32), 16)
    T2f = s2e[:, None] * T2
    c2 = o2e @ T2 + b2e
    S2 = _pool_group_select(16, 4, 4, _LANE)             # (256, 512), padded
    t2, b2 = T2f @ S2, c2 @ S2

    # ---- fc1: bnfc folded; rows padded 64 -> 128 (pad rows are zero).
    WfcT = np.asarray(p["wfc"], np.float32).T            # (64, hidden_g)
    Wf = sfc[:, None] * WfcT
    bf = ofc @ WfcT + np.asarray(p["bfc"], np.float32)
    wfc = np.zeros((_LANE, WfcT.shape[1]), np.float32)
    wfc[:64] = Wf

    # Matmul weights stored bf16 (halves weight DMA); biases kept f32.
    return dict(
        t1=jnp.asarray(t1, dtype=jnp.bfloat16),
        b1=jnp.asarray(b1, dtype=jnp.float32).reshape(1, -1),
        t2=jnp.asarray(t2, dtype=jnp.bfloat16),
        b2=jnp.asarray(b2, dtype=jnp.float32).reshape(1, -1),
        wfc=jnp.asarray(wfc, dtype=jnp.bfloat16),
        bfc=jnp.asarray(bf, dtype=jnp.float32).reshape(1, -1),
    )


# ----------------------------------------------------------------------------
# Deterministic params + plain-JAX reference (same eval-mode math).
# ----------------------------------------------------------------------------
def init_params(key, num_channel, hidden_g):
    ks = jax.random.split(key, 18)

    def u(k, shape, scale):
        return jax.random.uniform(k, shape, jnp.float32, -scale, scale)

    return dict(
        w1=u(ks[0], (8, num_channel, 3, 3), 0.3),
        b1=u(ks[1], (8,), 0.1),
        w2=u(ks[2], (16, 8, 3, 3), 0.2),
        b2=u(ks[3], (16,), 0.1),
        wfc=u(ks[4], (hidden_g, 64), 0.15),
        bfc=u(ks[5], (hidden_g,), 0.1),
        bn1_g=1.0 + u(ks[6], (num_channel,), 0.1),
        bn1_b=u(ks[7], (num_channel,), 0.1),
        bn1_m=u(ks[8], (num_channel,), 0.2),
        bn1_v=1.0 + u(ks[9], (num_channel,), 0.1),
        bn2_g=1.0 + u(ks[10], (8,), 0.1),
        bn2_b=u(ks[11], (8,), 0.1),
        bn2_m=u(ks[12], (8,), 0.2),
        bn2_v=1.0 + u(ks[13], (8,), 0.1),
        bnfc_g=1.0 + u(ks[14], (64,), 0.1),
        bnfc_b=u(ks[15], (64,), 0.1),
        bnfc_m=u(ks[16], (64,), 0.2),
        bnfc_v=1.0 + u(ks[17], (64,), 0.1),
    )


def reference_forward(x, p):
    eps = 1e-5
    B = x.shape[0]

    def bn2d(h, g, b, m, v):
        s = g / jnp.sqrt(v + eps)
        return h * s[None, :, None, None] + (b - m * s)[None, :, None, None]

    def conv(h, w, b):
        y = lax.conv_general_dilated(
            h, w, window_strides=(1, 1), padding=((1, 1), (1, 1)),
            dimension_numbers=("NCHW", "OIHW", "NCHW"),
            precision=lax.Precision.HIGHEST)
        return y + b[None, :, None, None]

    def maxpool2(h):
        return lax.reduce_window(h, -jnp.inf, lax.max,
                                 (1, 1, 2, 2), (1, 1, 2, 2), "VALID")

    h = bn2d(x, p["bn1_g"], p["bn1_b"], p["bn1_m"], p["bn1_v"])
    h = jnp.maximum(maxpool2(conv(h, p["w1"], p["b1"])), 0.0)
    h = bn2d(h, p["bn2_g"], p["bn2_b"], p["bn2_m"], p["bn2_v"])
    h = jnp.maximum(maxpool2(conv(h, p["w2"], p["b2"])), 0.0)
    h = h.reshape(B, 64)
    s = p["bnfc_g"] / jnp.sqrt(p["bnfc_v"] + eps)
    h = h * s[None, :] + (p["bnfc_b"] - p["bnfc_m"] * s)[None, :]
    return jnp.dot(h, p["wfc"].T, precision=lax.Precision.HIGHEST) + p["bfc"][None, :]


if __name__ == "__main__":
    # x.view(-1, 64) after two 2x2 pools with 16 channels implies an 8x8 input.
    # B=256 with a 128-row batch tile -> grid=(2,), batch axis "parallel".
    B, num_channel, hidden_g = 256, 4, 128

    key = jax.random.PRNGKey(0)
    kparam, kx = jax.random.split(key)
    params = init_params(kparam, num_channel, hidden_g)
    kernel_params = prepare_kernel_params(params)

    x = jax.random.normal(kx, (B, num_channel, 8, 8), jnp.float32)

    out = convnet_forward(x, kernel_params)
    out = jax.block_until_ready(out)

    ref = reference_forward(x, params)
    assert out.shape == (B, hidden_g)
    max_err = float(jnp.max(jnp.abs(out - ref)))
    # bf16-stored weights -> loosened tolerance vs the f32 HIGHEST reference.
    assert jnp.allclose(out, ref, atol=3e-2, rtol=3e-2), f"mismatch vs ref: {max_err}"

    print("KERNEL_OK")
</pallas_src>

<mosaic_0001>
module attributes {stable_mosaic.version = 11 : i64} {
  func.func @_convnet_kernel(%arg0: i32, %arg1: memref<128x256xf32, #tpu.memory_space<vmem>>, %arg2: memref<256x512xbf16, #tpu.memory_space<vmem>>, %arg3: memref<1x512xf32, #tpu.memory_space<vmem>>, %arg4: memref<128x512xbf16, #tpu.memory_space<vmem>>, %arg5: memref<1x512xf32, #tpu.memory_space<vmem>>, %arg6: memref<128x128xbf16, #tpu.memory_space<vmem>>, %arg7: memref<1x128xf32, #tpu.memory_space<vmem>>, %arg8: memref<128x128xf32, #tpu.memory_space<vmem>>) attributes {dimension_semantics = [#tpu.dimension_semantics<parallel>], iteration_bounds = array<i64: 2>, scalar_prefetch = 0 : i64, scratch_operands = 0 : i64, tpu.core_type = #tpu.core_type<tc>, window_params = [{transform_indices = @transform_0, window_bounds = array<i64: 128, 256>}, {pipeline_mode = #tpu.pipeline_mode<synchronous>, transform_indices = @transform_1, window_bounds = array<i64: 256, 512>}, {pipeline_mode = #tpu.pipeline_mode<synchronous>, transform_indices = @transform_2, window_bounds = array<i64: 1, 512>}, {pipeline_mode = #tpu.pipeline_mode<synchronous>, transform_indices = @transform_3, window_bounds = array<i64: 128, 512>}, {pipeline_mode = #tpu.pipeline_mode<synchronous>, transform_indices = @transform_4, window_bounds = array<i64: 1, 512>}, {pipeline_mode = #tpu.pipeline_mode<synchronous>, transform_indices = @transform_5, window_bounds = array<i64: 128, 128>}, {pipeline_mode = #tpu.pipeline_mode<synchronous>, transform_indices = @transform_6, window_bounds = array<i64: 1, 128>}, {transform_indices = @transform_7, window_bounds = array<i64: 128, 128>}]} {
    %c0 = arith.constant 0 : index
    %c0_0 = arith.constant 0 : index
    %0 = vector.load %arg1[%c0, %c0_0] : memref<128x256xf32, #tpu.memory_space<vmem>>, vector<128x256xf32>
    %c0_1 = arith.constant 0 : index
    %c0_2 = arith.constant 0 : index
    %1 = vector.load %arg2[%c0_1, %c0_2] : memref<256x512xbf16, #tpu.memory_space<vmem>>, vector<256x512xbf16>
    %2 = arith.extf %1 : vector<256x512xbf16> to vector<256x512xf32>
    %cst = arith.constant dense<0.000000e+00> : vector<128x512xf32>
    %3 = tpu.matmul %0, %2, %cst {dimension_numbers = #tpu.dot_dimension_numbers<[1], [0], [0], [1], [0, 0, 1, 1], [], []>} : vector<128x256xf32>, vector<256x512xf32>, vector<128x512xf32> -> vector<128x512xf32>
    %c0_3 = arith.constant 0 : index
    %c0_4 = arith.constant 0 : index
    %4 = vector.load %arg3[%c0_3, %c0_4] : memref<1x512xf32, #tpu.memory_space<vmem>>, vector<1x512xf32>
    %5 = vector.broadcast %4 : vector<1x512xf32> to vector<128x512xf32>
    %6 = arith.addf %3, %5 : vector<128x512xf32>
    %7 = vector.extract_strided_slice %6 {offsets = [0, 0], sizes = [128, 128], strides = [1, 1]} : vector<128x512xf32> to vector<128x128xf32>
    %8 = vector.extract_strided_slice %6 {offsets = [0, 128], sizes = [128, 128], strides = [1, 1]} : vector<128x512xf32> to vector<128x128xf32>
    %9 = arith.maximumf %7, %8 : vector<128x128xf32>
    %10 = vector.extract_strided_slice %6 {offsets = [0, 256], sizes = [128, 128], strides = [1, 1]} : vector<128x512xf32> to vector<128x128xf32>
    %11 = vector.extract_strided_slice %6 {offsets = [0, 384], sizes = [128, 128], strides = [1, 1]} : vector<128x512xf32> to vector<128x128xf32>
    %12 = arith.maximumf %10, %11 : vector<128x128xf32>
    %13 = arith.maximumf %9, %12 : vector<128x128xf32>
    %cst_5 = arith.constant 0.000000e+00 : f32
    %14 = vector.broadcast %cst_5 : f32 to vector<128x128xf32>
    %15 = arith.maximumf %13, %14 : vector<128x128xf32>
    %c0_6 = arith.constant 0 : index
    %c0_7 = arith.constant 0 : index
    %16 = vector.load %arg4[%c0_6, %c0_7] : memref<128x512xbf16, #tpu.memory_space<vmem>>, vector<128x512xbf16>
    %17 = arith.extf %16 : vector<128x512xbf16> to vector<128x512xf32>
    %cst_8 = arith.constant dense<0.000000e+00> : vector<128x512xf32>
    %18 = tpu.matmul %15, %17, %cst_8 {dimension_numbers = #tpu.dot_dimension_numbers<[1], [0], [0], [1], [0, 0, 1, 1], [], []>} : vector<128x128xf32>, vector<128x512xf32>, vector<128x512xf32> -> vector<128x512xf32>
    %c0_9 = arith.constant 0 : index
    %c0_10 = arith.constant 0 : index
    %19 = vector.load %arg5[%c0_9, %c0_10] : memref<1x512xf32, #tpu.memory_space<vmem>>, vector<1x512xf32>
    %20 = vector.broadcast %19 : vector<1x512xf32> to vector<128x512xf32>
    %21 = arith.addf %18, %20 : vector<128x512xf32>
    %22 = vector.extract_strided_slice %21 {offsets = [0, 0], sizes = [128, 128], strides = [1, 1]} : vector<128x512xf32> to vector<128x128xf32>
    %23 = vector.extract_strided_slice %21 {offsets = [0, 128], sizes = [128, 128], strides = [1, 1]} : vector<128x512xf32> to vector<128x128xf32>
    %24 = arith.maximumf %22, %23 : vector<128x128xf32>
    %25 = vector.extract_strided_slice %21 {offsets = [0, 256], sizes = [128, 128], strides = [1, 1]} : vector<128x512xf32> to vector<128x128xf32>
    %26 = vector.extract_strided_slice %21 {offsets = [0, 384], sizes = [128, 128], strides = [1, 1]} : vector<128x512xf32> to vector<128x128xf32>
    %27 = arith.maximumf %25, %26 : vector<128x128xf32>
    %28 = arith.maximumf %24, %27 : vector<128x128xf32>
    %cst_11 = arith.constant 0.000000e+00 : f32
    %29 = vector.broadcast %cst_11 : f32 to vector<128x128xf32>
    %30 = arith.maximumf %28, %29 : vector<128x128xf32>
    %c0_12 = arith.constant 0 : index
    %c0_13 = arith.constant 0 : index
    %31 = vector.load %arg6[%c0_12, %c0_13] : memref<128x128xbf16, #tpu.memory_space<vmem>>, vector<128x128xbf16>
    %32 = arith.extf %31 : vector<128x128xbf16> to vector<128x128xf32>
    %cst_14 = arith.constant dense<0.000000e+00> : vector<128x128xf32>
    %33 = tpu.matmul %30, %32, %cst_14 {dimension_numbers = #tpu.dot_dimension_numbers<[1], [0], [0], [1], [0, 0, 1, 1], [], []>} : vector<128x128xf32>, vector<128x128xf32>, vector<128x128xf32> -> vector<128x128xf32>
    %c0_15 = arith.constant 0 : index
    %c0_16 = arith.constant 0 : index
    %34 = vector.load %arg7[%c0_15, %c0_16] : memref<1x128xf32, #tpu.memory_space<vmem>>, vector<1x128xf32>
    %35 = vector.broadcast %34 : vector<1x128xf32> to vector<128x128xf32>
    %36 = arith.addf %33, %35 : vector<128x128xf32>
    %c0_17 = arith.constant 0 : index
    %c0_18 = arith.constant 0 : index
    %37 = vector.load %arg8[%c0_17, %c0_18] : memref<128x128xf32, #tpu.memory_space<vmem>>, vector<128x128xf32>
    tpu.vector_store %arg8[%c0_17, %c0_18], %36 {strides = array<i32>} : memref<128x128xf32, #tpu.memory_space<vmem>>, vector<128x128xf32>,
    return
  }
  func.func @transform_0(%arg0: i32) -> (i32, i32) {
    %c0_i32 = arith.constant 0 : i32
    %c0_i32_0 = arith.constant 0 : i32
    return %arg0, %c0_i32 : i32, i32
  }
  func.func @transform_1(%arg0: i32) -> (i32, i32) {
    %c0_i32 = arith.constant 0 : i32
    %c0_i32_0 = arith.constant 0 : i32
    %c0_i32_1 = arith.constant 0 : i32
    return %c0_i32, %c0_i32_0 : i32, i32
  }
  func.func @transform_2(%arg0: i32) -> (i32, i32) {
    %c0_i32 = arith.constant 0 : i32
    %c0_i32_0 = arith.constant 0 : i32
    %c0_i32_1 = arith.constant 0 : i32
    return %c0_i32, %c0_i32_0 : i32, i32
  }
  func.func @transform_3(%arg0: i32) -> (i32, i32) {
    %c0_i32 = arith.constant 0 : i32
    %c0_i32_0 = arith.constant 0 : i32
    %c0_i32_1 = arith.constant 0 : i32
    return %c0_i32, %c0_i32_0 : i32, i32
  }
  func.func @transform_4(%arg0: i32) -> (i32, i32) {
    %c0_i32 = arith.constant 0 : i32
    %c0_i32_0 = arith.constant 0 : i32
    %c0_i32_1 = arith.constant 0 : i32
    return %c0_i32, %c0_i32_0 : i32, i32
  }
  func.func @transform_5(%arg0: i32) -> (i32, i32) {
    %c0_i32 = arith.constant 0 : i32
    %c0_i32_0 = arith.constant 0 : i32
    %c0_i32_1 = arith.constant 0 : i32
    return %c0_i32, %c0_i32_0 : i32, i32
  }
  func.func @transform_6(%arg0: i32) -> (i32, i32) {
    %c0_i32 = arith.constant 0 : i32
    %c0_i32_0 = arith.constant 0 : i32
    %c0_i32_1 = arith.constant 0 : i32
    return %c0_i32, %c0_i32_0 : i32, i32
  }
  func.func @transform_7(%arg0: i32) -> (i32, i32) {
    %c0_i32 = arith.constant 0 : i32
    %c0_i32_0 = arith.constant 0 : i32
    return %arg0, %c0_i32 : i32, i32
  }
}

</mosaic_0001>

<llo_original>
// kernel: tpu_custom_call.1
$region0: #{tpu_custom_call.1}
  #allocation0 [shape = 'u32[]', space=smem, size = 0x4, offset = 0x4, fixed_abs, tag = 'smem constant byte address 0x4 - core index']
  #allocation1 [shape = 'u32[144,128]{1,0:T(1,128)}', space=vmem, size = 0x12000, scoped, tag = 'internal scratch']
  %s0 = inlined_call_operand.hbm [shape: f32[256,256], index: 0, kind: input, shape index: {}]
  %s1 = inlined_call_operand.hbm [shape: bf16[256,512], index: 1, kind: input, shape index: {}]
  %s2 = inlined_call_operand.vmem [shape: f32[1,512], index: 2, kind: input, shape index: {}]
  %s3 = inlined_call_operand.hbm [shape: bf16[128,512], index: 3, kind: input, shape index: {}]
  %s4 = inlined_call_operand.vmem [shape: f32[1,512], index: 4, kind: input, shape index: {}]
  %s5 = inlined_call_operand.hbm [shape: bf16[128,128], index: 5, kind: input, shape index: {}]
  %s6 = inlined_call_operand.vmem [shape: f32[1,128], index: 6, kind: input, shape index: {}]
  %s7 = inlined_call_operand.hbm [shape: f32[256,128], index: 7, kind: output, shape index: {}]
  %s8 = sld [smem:[#allocation0]]
  $region77: #{tpu_custom_call.1} parent=0
    _
  %s10 = ssub.s32 1, %s8
  %s11 = scalar_select 0, %s10, %s8
  $region1: #{tpu_custom_call.1} parent=0
    #allocation2 [shape = 'u8[262144]{0}', space=vmem, size = 0x40000, scoped, tag = 'input window, operand 0']
    #allocation3 [shape = 's32[2]{0}', space=sflag, size = 0x8, scoped, tag = 'scoped memory for tpu_custom_call.1']
    #allocation4 [shape = 's32[2]{0}', space=sflag, size = 0x8, scoped, tag = 'scoped memory for tpu_custom_call.1']
    #allocation5 [shape = 'u8[262144]{0}', space=vmem, size = 0x40000, scoped, tag = 'input window, operand 1, single buffered']
    #allocation6 [shape = 's32[1]{0}', space=sflag, size = 0x4, scoped, tag = 'scoped memory for tpu_custom_call.1']
    #allocation7 [shape = 'u8[131072]{0}', space=vmem, size = 0x20000, scoped, tag = 'input window, operand 3, single buffered']
    #allocation8 [shape = 'u8[32768]{0}', space=vmem, size = 0x8000, scoped, tag = 'input window, operand 5, single buffered']
    #allocation9 [shape = 's32[1]{0}', space=sflag, size = 0x4, scoped, tag = 'scoped memory for tpu_custom_call.1']
    #allocation10 [shape = 'u8[131072]{0}', space=vmem, size = 0x20000, scoped, tag = 'output window, operand 0']
    %12 = vsyncpa [#allocation3], 0
    %s13 = scalar_lea.sflag [#allocation3], 1
    %14 = vsyncpa %s13, 0
    %15 = vsyncpa [#allocation6], 0
    %16 = vsyncpa [#allocation9], 0
    %17 = vsyncpa [#allocation4], 0
    %s18 = scalar_lea.sflag [#allocation4], 1
    %19 = vsyncpa %s18, 0
    loop: start=0, step=1, limit=4
    $region2: #{tpu_custom_call.1} parent=1 // loop_pre_header
      _
    $region3: #{tpu_custom_call.1} parent=1 // loop_header
      %s21 = sphi 0, %s25
      %p22 = scmp.ge.s32.totalorder %s21, 4
      %s31 = sphi 0, %s33
      %s34 = sphi 0, %s31
      %s35 = sphi 0, %s34
      %s51 = sphi 0, %s35
      %s55 = sphi 0, %s55
      %s57 = sphi 0, %s55
      %s58 = sphi 0, %s57
      %s72 = sphi 0, %s58
      %s76 = sphi 0, %s76
      %s78 = sphi 0, %s76
      %s79 = sphi 0, %s78
      %s93 = sphi 0, %s79
      %s97 = sphi 0, %s97
      %s99 = sphi 0, %s97
      %s100 = sphi 0, %s99
      %s114 = sphi 0, %s100
      %s118 = sphi 0, %s118
      %s120 = sphi 0, %s118
      %s121 = sphi 0, %s120
      %s135 = sphi 0, %s121
      %s139 = sphi 0, %s139
      %s141 = sphi 0, %s139
      %s142 = sphi 0, %s141
      %s156 = sphi 0, %s142
      %s160 = sphi 0, %s160
      %s162 = sphi 0, %s160
      %s163 = sphi 0, %s162
      %s177 = sphi 0, %s163
      %s183 = sphi 0, %s185
      %s186 = sphi 0, %s183
      %s187 = sphi 0, %s186
      %s203 = sphi 0, %s187
    $region4: #{tpu_custom_call.1} parent=1 // loop_header_branch
      %24 = sbr.rel (%p22) target = $region8
    $region5: #{tpu_custom_call.1} parent=1 // loop_body
      %s26 = ssub.s32 %s21, 1
      %s27 = ssub.s32 %s21, 2
      %s28 = sadd.s32 %s21, 1
      %s29 = ssub.s32 %s21, %s28
      %p30 = scmp.eq.s32.totalorder %s29, 0
      %s32 = sadd.s32 %s31, 1
      %s33 = scalar_select %p30, %s31, %s32
      %p36 = pneg %p30
      %p37 = scmp.eq.s32.totalorder %s21, 1
      %p38 = por %p36, %p37
      %p39 = scmp.ne.s32.totalorder %s31, %s34
      %p40 = scmp.eq.s32.totalorder %s21, 0
      %p41 = por %p39, %p40
      %p42 = scmp.ne.s32.totalorder %s31, %s34
      %p43 = scmp.eq.s32.totalorder %s26, 1
      %p44 = por %p42, %p43
      %p45 = scmp.ne.s32.totalorder %s34, %s35
      %p46 = scmp.eq.s32.totalorder %s26, 0
      %p47 = por %p45, %p46
      %p48 = scmp.ne.s32.totalorder %s34, %s35
      %p49 = scmp.eq.s32.totalorder %s27, 1
      %p50 = por %p48, %p49
      %p52 = scmp.ne.s32.totalorder %s35, %s51
      %p53 = scmp.eq.s32.totalorder %s27, 0
      %p54 = por %p52, %p53
      %s56 = sadd.s32 %s55, 1
      %p59 = scmp.eq.s32.totalorder %s21, 1
      %p60 = scmp.ne.s32.totalorder %s55, %s57
      %p61 = scmp.eq.s32.totalorder %s21, 0
      %p62 = por %p60, %p61
      %p63 = scmp.ne.s32.totalorder %s55, %s57
      %p64 = scmp.eq.s32.totalorder %s26, 1
      %p65 = por %p63, %p64
      %p66 = scmp.ne.s32.totalorder %s57, %s58
      %p67 = scmp.eq.s32.totalorder %s26, 0
      %p68 = por %p66, %p67
      %p69 = scmp.ne.s32.totalorder %s57, %s58
      %p70 = scmp.eq.s32.totalorder %s27, 1
      %p71 = por %p69, %p70
      %p73 = scmp.ne.s32.totalorder %s58, %s72
      %p74 = scmp.eq.s32.totalorder %s27, 0
      %p75 = por %p73, %p74
      %s77 = sadd.s32 %s76, 1
      %p80 = scmp.eq.s32.totalorder %s21, 1
      %p81 = scmp.ne.s32.totalorder %s76, %s78
      %p82 = scmp.eq.s32.totalorder %s21, 0
      %p83 = por %p81, %p82
      %p84 = scmp.ne.s32.totalorder %s76, %s78
      %p85 = scmp.eq.s32.totalorder %s26, 1
      %p86 = por %p84, %p85
      %p87 = scmp.ne.s32.totalorder %s78, %s79
      %p88 = scmp.eq.s32.totalorder %s26, 0
      %p89 = por %p87, %p88
      %p90 = scmp.ne.s32.totalorder %s78, %s79
      %p91 = scmp.eq.s32.totalorder %s27, 1
      %p92 = por %p90, %p91
      %p94 = scmp.ne.s32.totalorder %s79, %s93
      %p95 = scmp.eq.s32.totalorder %s27, 0
      %p96 = por %p94, %p95
      %s98 = sadd.s32 %s97, 1
      %p101 = scmp.eq.s32.totalorder %s21, 1
      %p102 = scmp.ne.s32.totalorder %s97, %s99
      %p103 = scmp.eq.s32.totalorder %s21, 0
      %p104 = por %p102, %p103
      %p105 = scmp.ne.s32.totalorder %s97, %s99
      %p106 = scmp.eq.s32.totalorder %s26, 1
      %p107 = por %p105, %p106
      %p108 = scmp.ne.s32.totalorder %s99, %s100
      %p109 = scmp.eq.s32.totalorder %s26, 0
      %p110 = por %p108, %p109
      %p111 = scmp.ne.s32.totalorder %s99, %s100
      %p112 = scmp.eq.s32.totalorder %s27, 1
      %p113 = por %p111, %p112
      %p115 = scmp.ne.s32.totalorder %s100, %s114
      %p116 = scmp.eq.s32.totalorder %s27, 0
      %p117 = por %p115, %p116
      %s119 = sadd.s32 %s118, 1
      %p122 = scmp.eq.s32.totalorder %s21, 1
      %p123 = scmp.ne.s32.totalorder %s118, %s120
      %p124 = scmp.eq.s32.totalorder %s21, 0
      %p125 = por %p123, %p124
      %p126 = scmp.ne.s32.totalorder %s118, %s120
      %p127 = scmp.eq.s32.totalorder %s26, 1
      %p128 = por %p126, %p127
      %p129 = scmp.ne.s32.totalorder %s120, %s121
      %p130 = scmp.eq.s32.totalorder %s26, 0
      %p131 = por %p129, %p130
      %p132 = scmp.ne.s32.totalorder %s120, %s121
      %p133 = scmp.eq.s32.totalorder %s27, 1
      %p134 = por %p132, %p133
      %p136 = scmp.ne.s32.totalorder %s121, %s135
      %p137 = scmp.eq.s32.totalorder %s27, 0
      %p138 = por %p136, %p137
      %s140 = sadd.s32 %s139, 1
      %p143 = scmp.eq.s32.totalorder %s21, 1
      %p144 = scmp.ne.s32.totalorder %s139, %s141
      %p145 = scmp.eq.s32.totalorder %s21, 0
      %p146 = por %p144, %p145
      %p147 = scmp.ne.s32.totalorder %s139, %s141
      %p148 = scmp.eq.s32.totalorder %s26, 1
      %p149 = por %p147, %p148
      %p150 = scmp.ne.s32.totalorder %s141, %s142
      %p151 = scmp.eq.s32.totalorder %s26, 0
      %p152 = por %p150, %p151
      %p153 = scmp.ne.s32.totalorder %s141, %s142
      %p154 = scmp.eq.s32.totalorder %s27, 1
      %p155 = por %p153, %p154
      %p157 = scmp.ne.s32.totalorder %s142, %s156
      %p158 = scmp.eq.s32.totalorder %s27, 0
      %p159 = por %p157, %p158
      %s161 = sadd.s32 %s160, 1
      %p164 = scmp.eq.s32.totalorder %s21, 1
      %p165 = scmp.ne.s32.totalorder %s160, %s162
      %p166 = scmp.eq.s32.totalorder %s21, 0
      %p167 = por %p165, %p166
      %p168 = scmp.ne.s32.totalorder %s160, %s162
      %p169 = scmp.eq.s32.totalorder %s26, 1
      %p170 = por %p168, %p169
      %p171 = scmp.ne.s32.totalorder %s162, %s163
      %p172 = scmp.eq.s32.totalorder %s26, 0
      %p173 = por %p171, %p172
      %p174 = scmp.ne.s32.totalorder %s162, %s163
      %p175 = scmp.eq.s32.totalorder %s27, 1
      %p176 = por %p174, %p175
      %p178 = scmp.ne.s32.totalorder %s163, %s177
      %p179 = scmp.eq.s32.totalorder %s27, 0
      %p180 = por %p178, %p179
      %s181 = ssub.s32 %s21, %s28
      %p182 = scmp.eq.s32.totalorder %s181, 0
      %s184 = sadd.s32 %s183, 1
      %s185 = scalar_select %p182, %s183, %s184
      %p188 = pneg %p182
      %p189 = scmp.eq.s32.totalorder %s21, 1
      %p190 = por %p188, %p189
      %p191 = scmp.ne.s32.totalorder %s183, %s186
      %p192 = scmp.eq.s32.totalorder %s21, 0
      %p193 = por %p191, %p192
      %p194 = scmp.ne.s32.totalorder %s183, %s186
      %p195 = scmp.eq.s32.totalorder %s26, 1
      %p196 = por %p194, %p195
      %p197 = scmp.ne.s32.totalorder %s186, %s187
      %p198 = scmp.eq.s32.totalorder %s26, 0
      %p199 = por %p197, %p198
      %p200 = scmp.ne.s32.totalorder %s186, %s187
      %p201 = scmp.eq.s32.totalorder %s27, 1
      %p202 = por %p200, %p201
      %p204 = scmp.ne.s32.totalorder %s187, %s203
      %p205 = scmp.eq.s32.totalorder %s27, 0
      %p206 = por %p204, %p205
      %p207 = scmp.le.s32.totalorder 1, %s21
      %p208 = scmp.lt.s32.totalorder %s21, 3
      %p209 = pnand %p207, %p208
      %p210 = pneg %p209
      // Predicated region
      $region9: #{tpu_custom_call.1} parent=5 // pred_check
        _
      $region10: #{tpu_custom_call.1} parent=5 // pred_check_branch
        %212 = sbr.rel (%p209) target = $region12
      $region11: #{tpu_custom_call.1} parent=5 // pred_region
        %s213 = ssub.s32 %s21, 1
        // Predicated region
        $region13: #{tpu_custom_call.1} parent=11 // pred_check
          %p214 = pneg %p68
        $region14: #{tpu_custom_call.1} parent=11 // pred_check_branch
          %216 = sbr.rel (%p214) target = $region16
        $region15: #{tpu_custom_call.1} parent=11 // pred_region
          %s218 = ssub.s32 8192, 8192
          %219 = vsyncadd [#allocation6], %s218
          %s220 = sshll.u32 [#allocation5], 4
          %s221 = int_to_ptr.vmem [resolvable:$true] %s220
          %226 = dma.hbm_to_vmem [thread:$0]  %s1, 8192, %s221, [#allocation6], 256, 256, 16
        $region16: #{tpu_custom_call.1} parent=11 // pred_fallthru
          _
        // Predicated region
        $region17: #{tpu_custom_call.1} parent=11 // pred_check
          %p227 = pneg %p89
        $region18: #{tpu_custom_call.1} parent=11 // pred_check_branch
          %229 = sbr.rel (%p227) target = $region20
        $region19: #{tpu_custom_call.1} parent=11 // pred_region
          _
        $region20: #{tpu_custom_call.1} parent=11 // pred_fallthru
          _
        // Predicated region
        $region21: #{tpu_custom_call.1} parent=11 // pred_check
          %p230 = pneg %p110
        $region22: #{tpu_custom_call.1} parent=11 // pred_check_branch
          %232 = sbr.rel (%p230) target = $region24
        $region23: #{tpu_custom_call.1} parent=11 // pred_region
          %s234 = ssub.s32 4096, 4096
          %235 = vsyncadd [#allocation6], %s234
          %s236 = sshll.u32 [#allocation7], 4
          %s237 = int_to_ptr.vmem [resolvable:$true] %s236
          %242 = dma.hbm_to_vmem [thread:$0]  %s3, 4096, %s237, [#allocation6], 256, 256, 16
        $region24: #{tpu_custom_call.1} parent=11 // pred_fallthru
          _
        // Predicated region
        $region25: #{tpu_custom_call.1} parent=11 // pred_check
          %p243 = pneg %p131
        $region26: #{tpu_custom_call.1} parent=11 // pred_check_branch
          %245 = sbr.rel (%p243) target = $region28
        $region27: #{tpu_custom_call.1} parent=11 // pred_region
          _
        $region28: #{tpu_custom_call.1} parent=11 // pred_fallthru
          _
        // Predicated region
        $region29: #{tpu_custom_call.1} parent=11 // pred_check
          %p246 = pneg %p152
        $region30: #{tpu_custom_call.1} parent=11 // pred_check_branch
          %248 = sbr.rel (%p246) target = $region32
        $region31: #{tpu_custom_call.1} parent=11 // pred_region
          %s250 = ssub.s32 1024, 1024
          %251 = vsyncadd [#allocation9], %s250
          %s252 = sshll.u32 [#allocation8], 4
          %s253 = int_to_ptr.vmem [resolvable:$true] %s252
          %258 = dma.hbm_to_vmem [thread:$0]  %s5, 1024, %s253, [#allocation9], 64, 64, 4
        $region32: #{tpu_custom_call.1} parent=11 // pred_fallthru
          _
        // Predicated region
        $region33: #{tpu_custom_call.1} parent=11 // pred_check
          %p259 = pneg %p173
        $region34: #{tpu_custom_call.1} parent=11 // pred_check_branch
          %261 = sbr.rel (%p259) target = $region36
        $region35: #{tpu_custom_call.1} parent=11 // pred_region
          _
        $region36: #{tpu_custom_call.1} parent=11 // pred_fallthru
          _
      $region12: #{tpu_custom_call.1} parent=5 // pred_fallthru
        _
      %p262 = scmp.lt.s32.totalorder %s21, 2
      // Predicated region
      $region37: #{tpu_custom_call.1} parent=5 // pred_check
        %p263 = pneg %p262
      $region38: #{tpu_custom_call.1} parent=5 // pred_check_branch
        %265 = sbr.rel (%p263) target = $region40
      $region39: #{tpu_custom_call.1} parent=5 // pred_region
        // Predicated region
        $region41: #{tpu_custom_call.1} parent=39 // pred_check
          %p266 = pneg %p41
        $region42: #{tpu_custom_call.1} parent=39 // pred_check_branch
          %268 = sbr.rel (%p266) target = $region44
        $region43: #{tpu_custom_call.1} parent=39 // pred_region
          %s269 = sand.u32 %s31, 1
          %s270 = scalar_lea.sflag [#allocation3], %s269
          %s271 = sand.u32 %s31, 1
          %s272 = smul.addr %s271, 256
          %s273 = scalar_lea.vmem [#allocation2], %s272
          %s274 = smul.u32 16, %s21
          %s276 = ssub.s32 4096, 4096
          %277 = vsyncadd %s270, %s276
          %s278 = smul.addr %s274, 2
          %s279 = smul.addr %s278, 128
          %s280 = scalar_lea.hbm %s0, %s279
          %s281 = sshll.u32 %s273, 4
          %s282 = int_to_ptr.vmem [resolvable:$true] %s281
          %287 = dma.hbm_to_vmem [thread:$0]  %s280, 4096, %s282, %s270, 256, 256, 16
        $region44: #{tpu_custom_call.1} parent=39 // pred_fallthru
          _
      $region40: #{tpu_custom_call.1} parent=5 // pred_fallthru
        _
      %p288 = scmp.le.s32.totalorder 1, %s21
      %p289 = scmp.lt.s32.totalorder %s21, 3
      %p290 = pnand %p288, %p289
      %p291 = pneg %p290
      // Predicated region
      $region45: #{tpu_custom_call.1} parent=5 // pred_check
        _
      $region46: #{tpu_custom_call.1} parent=5 // pred_check_branch
        %293 = sbr.rel (%p290) target = $region48
      $region47: #{tpu_custom_call.1} parent=5 // pred_region
        %s294 = ssub.s32 %s21, 1
        %s295 = sand.u32 %s34, 1
        %s296 = scalar_lea.sflag [#allocation3], %s295
        %s297 = sand.u32 %s34, 1
        %s298 = smul.addr %s297, 256
        %s299 = scalar_lea.vmem [#allocation2], %s298
        // Predicated region
        $region49: #{tpu_custom_call.1} parent=47 // pred_check
          %p300 = pneg %p47
        $region50: #{tpu_custom_call.1} parent=47 // pred_check_branch
          %302 = sbr.rel (%p300) target = $region52
        $region51: #{tpu_custom_call.1} parent=47 // pred_region
          %303 = dma.done %s296, 4096
        $region52: #{tpu_custom_call.1} parent=47 // pred_fallthru
          _
        // Predicated region
        $region53: #{tpu_custom_call.1} parent=47 // pred_check
          %p304 = pneg %p68
        $region54: #{tpu_custom_call.1} parent=47 // pred_check_branch
          %306 = sbr.rel (%p304) target = $region56
        $region55: #{tpu_custom_call.1} parent=47 // pred_region
          %307 = dma.done [#allocation6], 8192
        $region56: #{tpu_custom_call.1} parent=47 // pred_fallthru
          _
        // Predicated region
        $region57: #{tpu_custom_call.1} parent=47 // pred_check
          %p308 = pneg %p110
        $region58: #{tpu_custom_call.1} parent=47 // pred_check_branch
          %310 = sbr.rel (%p308) target = $region60
        $region59: #{tpu_custom_call.1} parent=47 // pred_region
          %311 = dma.done [#allocation6], 4096
        $region60: #{tpu_custom_call.1} parent=47 // pred_fallthru
          _
        // Predicated region
        $region61: #{tpu_custom_call.1} parent=47 // pred_check
          %p312 = pneg %p152
        $region62: #{tpu_custom_call.1} parent=47 // pred_check_branch
          %314 = sbr.rel (%p312) target = $region64
        $region63: #{tpu_custom_call.1} parent=47 // pred_region
          %315 = dma.done [#allocation9], 1024
        $region64: #{tpu_custom_call.1} parent=47 // pred_fallthru
          _
        %s316 = sand.u32 %s34, 1
        %s317 = scalar_lea.sflag [#allocation3], %s316
        %s318 = sand.u32 %s34, 1
        %s319 = smul.addr %s318, 256
        %s320 = scalar_lea.vmem [#allocation2], %s319
        %p321 = pneg %p47
        %p322 = pneg %p44
        %p323 = pneg %p68
        %p324 = pneg %p65
        %p325 = pneg %p89
        %p326 = pneg %p86
        %p327 = pneg %p110
        %p328 = pneg %p107
        %p329 = pneg %p131
        %p330 = pneg %p128
        %p331 = pneg %p152
        %p332 = pneg %p149
        %p333 = pneg %p173
        %p334 = pneg %p170
        %p335 = pneg %p199
        %p336 = pneg %p196
        %s337 = sand.u32 %s186, 1
        %s338 = scalar_lea.sflag [#allocation4], %s337
        %s339 = sand.u32 %s186, 1
        %s340 = smul.addr %s339, 128
        %s341 = scalar_lea.vmem [#allocation10], %s340
        %s342 = smul.u32 16, %s26
        %s343 = smul.u32 16, %s26
        %v344 = vld [vmem:[%s299] sm:$0xff]
        %v345 = vld [vmem:[%s299 + $0x8] sm:$0xff]
        %v346 = vld [vmem:[%s299 + $0x10] sm:$0xff]
        %v347 = vld [vmem:[%s299 + $0x18] sm:$0xff]
        %v348 = vld [vmem:[%s299 + $0x20] sm:$0xff]
        %v349 = vld [vmem:[%s299 + $0x28] sm:$0xff]
        %v350 = vld [vmem:[%s299 + $0x30] sm:$0xff]
        %v351 = vld [vmem:[%s299 + $0x38] sm:$0xff]
        %v352 = vld [vmem:[%s299 + $0x40] sm:$0xff]
        %v353 = vld [vmem:[%s299 + $0x48] sm:$0xff]
        %v354 = vld [vmem:[%s299 + $0x50] sm:$0xff]
        %v355 = vld [vmem:[%s299 + $0x58] sm:$0xff]
        %v356 = vld [vmem:[%s299 + $0x60] sm:$0xff]
        %v357 = vld [vmem:[%s299 + $0x68] sm:$0xff]
        %v358 = vld [vmem:[%s299 + $0x70] sm:$0xff]
        %v359 = vld [vmem:[%s299 + $0x78] sm:$0xff]
        %v360 = vld [vmem:[%s299 + $0x80] sm:$0xff]
        %v361 = vld [vmem:[%s299 + $0x88] sm:$0xff]
        %v362 = vld [vmem:[%s299 + $0x90] sm:$0xff]
        %v363 = vld [vmem:[%s299 + $0x98] sm:$0xff]
        %v364 = vld [vmem:[%s299 + $0xa0] sm:$0xff]
        %v365 = vld [vmem:[%s299 + $0xa8] sm:$0xff]
        %v366 = vld [vmem:[%s299 + $0xb0] sm:$0xff]
        %v367 = vld [vmem:[%s299 + $0xb8] sm:$0xff]
        %v368 = vld [vmem:[%s299 + $0xc0] sm:$0xff]
        %v369 = vld [vmem:[%s299 + $0xc8] sm:$0xff]
        %v370 = vld [vmem:[%s299 + $0xd0] sm:$0xff]
        %v371 = vld [vmem:[%s299 + $0xd8] sm:$0xff]
        %v372 = vld [vmem:[%s299 + $0xe0] sm:$0xff]
        %v373 = vld [vmem:[%s299 + $0xe8] sm:$0xff]
        %v374 = vld [vmem:[%s299 + $0xf0] sm:$0xff]
        %v375 = vld [vmem:[%s299 + $0xf8] sm:$0xff]
        %v376 = vld [vmem:[#allocation5] sm:$0xff]
        %v377 = vld [vmem:[#allocation5 + $0x8] sm:$0xff]
        %v378 = vld [vmem:[#allocation5 + $0x10] sm:$0xff]
        %v379 = vld [vmem:[#allocation5 + $0x18] sm:$0xff]
        %v380 = vld [vmem:[#allocation5 + $0x20] sm:$0xff]
        %v381 = vld [vmem:[#allocation5 + $0x28] sm:$0xff]
        %v382 = vld [vmem:[#allocation5 + $0x30] sm:$0xff]
        %v383 = vld [vmem:[#allocation5 + $0x38] sm:$0xff]
        %v384 = vld [vmem:[#allocation5 + $0x40] sm:$0xff]
        %v385 = vld [vmem:[#allocation5 + $0x48] sm:$0xff]
        %v386 = vld [vmem:[#allocation5 + $0x50] sm:$0xff]
        %v387 = vld [vmem:[#allocation5 + $0x58] sm:$0xff]
        %v388 = vld [vmem:[#allocation5 + $0x60] sm:$0xff]
        %v389 = vld [vmem:[#allocation5 + $0x68] sm:$0xff]
        %v390 = vld [vmem:[#allocation5 + $0x70] sm:$0xff]
        %v391 = vld [vmem:[#allocation5 + $0x78] sm:$0xff]
        %v392 = vld [vmem:[#allocation5 + $0x80] sm:$0xff]
        %v393 = vld [vmem:[#allocation5 + $0x88] sm:$0xff]
        %v394 = vld [vmem:[#allocation5 + $0x90] sm:$0xff]
        %v395 = vld [vmem:[#allocation5 + $0x98] sm:$0xff]
        %v396 = vld [vmem:[#allocation5 + $0xa0] sm:$0xff]
        %v397 = vld [vmem:[#allocation5 + $0xa8] sm:$0xff]
        %v398 = vld [vmem:[#allocation5 + $0xb0] sm:$0xff]
        %v399 = vld [vmem:[#allocation5 + $0xb8] sm:$0xff]
        %v400 = vld [vmem:[#allocation5 + $0xc0] sm:$0xff]
        %v401 = vld [vmem:[#allocation5 + $0xc8] sm:$0xff]
        %v402 = vld [vmem:[#allocation5 + $0xd0] sm:$0xff]
        %v403 = vld [vmem:[#allocation5 + $0xd8] sm:$0xff]
        %v404 = vld [vmem:[#allocation5 + $0xe0] sm:$0xff]
        %v405 = vld [vmem:[#allocation5 + $0xe8] sm:$0xff]
        %v406 = vld [vmem:[#allocation5 + $0xf0] sm:$0xff]
        %v407 = vld [vmem:[#allocation5 + $0xf8] sm:$0xff]
        %v408 = vld [vmem:[#allocation5 + $0x100] sm:$0xff]
        %v409 = vld [vmem:[#allocation5 + $0x108] sm:$0xff]
        %v410 = vld [vmem:[#allocation5 + $0x110] sm:$0xff]
        %v411 = vld [vmem:[#allocation5 + $0x118] sm:$0xff]
        %v412 = vld [vmem:[#allocation5 + $0x120] sm:$0xff]
        %v413 = vld [vmem:[#allocation5 + $0x128] sm:$0xff]
        %v414 = vld [vmem:[#allocation5 + $0x130] sm:$0xff]
        %v415 = vld [vmem:[#allocation5 + $0x138] sm:$0xff]
        %v416 = vld [vmem:[#allocation5 + $0x140] sm:$0xff]
        %v417 = vld [vmem:[#allocation5 + $0x148] sm:$0xff]
        %v418 = vld [vmem:[#allocation5 + $0x150] sm:$0xff]
        %v419 = vld [vmem:[#allocation5 + $0x158] sm:$0xff]
        %v420 = vld [vmem:[#allocation5 + $0x160] sm:$0xff]
        %v421 = vld [vmem:[#allocation5 + $0x168] sm:$0xff]
        %v422 = vld [vmem:[#allocation5 + $0x170] sm:$0xff]
        %v423 = vld [vmem:[#allocation5 + $0x178] sm:$0xff]
        %v424 = vld [vmem:[#allocation5 + $0x180] sm:$0xff]
        %v425 = vld [vmem:[#allocation5 + $0x188] sm:$0xff]
        %v426 = vld [vmem:[#allocation5 + $0x190] sm:$0xff]
        %v427 = vld [vmem:[#allocation5 + $0x198] sm:$0xff]
        %v428 = vld [vmem:[#allocation5 + $0x1a0] sm:$0xff]
        %v429 = vld [vmem:[#allocation5 + $0x1a8] sm:$0xff]
        %v430 = vld [vmem:[#allocation5 + $0x1b0] sm:$0xff]
        %v431 = vld [vmem:[#allocation5 + $0x1b8] sm:$0xff]
        %v432 = vld [vmem:[#allocation5 + $0x1c0] sm:$0xff]
        %v433 = vld [vmem:[#allocation5 + $0x1c8] sm:$0xff]
        %v434 = vld [vmem:[#allocation5 + $0x1d0] sm:$0xff]
        %v435 = vld [vmem:[#allocation5 + $0x1d8] sm:$0xff]
        %v436 = vld [vmem:[#allocation5 + $0x1e0] sm:$0xff]
        %v437 = vld [vmem:[#allocation5 + $0x1e8] sm:$0xff]
        %v438 = vld [vmem:[#allocation5 + $0x1f0] sm:$0xff]
        %v439 = vld [vmem:[#allocation5 + $0x1f8] sm:$0xff]
        %v440 = vunpack.c.l.bf16 %v376
        %v441 = vunpack.c.h.bf16 %v376
        %v442 = vunpack.c.l.bf16 %v377
        %v443 = vunpack.c.h.bf16 %v377
        %v444 = vunpack.c.l.bf16 %v378
        %v445 = vunpack.c.h.bf16 %v378
        %v446 = vunpack.c.l.bf16 %v379
        %v447 = vunpack.c.h.bf16 %v379
        %v448 = vunpack.c.l.bf16 %v380
        %v449 = vunpack.c.h.bf16 %v380
        %v450 = vunpack.c.l.bf16 %v381
        %v451 = vunpack.c.h.bf16 %v381
        %v452 = vunpack.c.l.bf16 %v382
        %v453 = vunpack.c.h.bf16 %v382
        %v454 = vunpack.c.l.bf16 %v383
        %v455 = vunpack.c.h.bf16 %v383
        %v456 = vunpack.c.l.bf16 %v384
        %v457 = vunpack.c.h.bf16 %v384
        %v458 = vunpack.c.l.bf16 %v385
        %v459 = vunpack.c.h.bf16 %v385
        %v460 = vunpack.c.l.bf16 %v386
        %v461 = vunpack.c.h.bf16 %v386
        %v462 = vunpack.c.l.bf16 %v387
        %v463 = vunpack.c.h.bf16 %v387
        %v464 = vunpack.c.l.bf16 %v388
        %v465 = vunpack.c.h.bf16 %v388
        %v466 = vunpack.c.l.bf16 %v389
        %v467 = vunpack.c.h.bf16 %v389
        %v468 = vunpack.c.l.bf16 %v390
        %v469 = vunpack.c.h.bf16 %v390
        %v470 = vunpack.c.l.bf16 %v391
        %v471 = vunpack.c.h.bf16 %v391
        %v472 = vunpack.c.l.bf16 %v392
        %v473 = vunpack.c.h.bf16 %v392
        %v474 = vunpack.c.l.bf16 %v393
        %v475 = vunpack.c.h.bf16 %v393
        %v476 = vunpack.c.l.bf16 %v394
        %v477 = vunpack.c.h.bf16 %v394
        %v478 = vunpack.c.l.bf16 %v395
        %v479 = vunpack.c.h.bf16 %v395
        %v480 = vunpack.c.l.bf16 %v396
        %v481 = vunpack.c.h.bf16 %v396
        %v482 = vunpack.c.l.bf16 %v397
        %v483 = vunpack.c.h.bf16 %v397
        %v484 = vunpack.c.l.bf16 %v398
        %v485 = vunpack.c.h.bf16 %v398
        %v486 = vunpack.c.l.bf16 %v399
        %v487 = vunpack.c.h.bf16 %v399
        %v488 = vunpack.c.l.bf16 %v400
        %v489 = vunpack.c.h.bf16 %v400
        %v490 = vunpack.c.l.bf16 %v401
        %v491 = vunpack.c.h.bf16 %v401
        %v492 = vunpack.c.l.bf16 %v402
        %v493 = vunpack.c.h.bf16 %v402
        %v494 = vunpack.c.l.bf16 %v403
        %v495 = vunpack.c.h.bf16 %v403
        %v496 = vunpack.c.l.bf16 %v404
        %v497 = vunpack.c.h.bf16 %v404
        %v498 = vunpack.c.l.bf16 %v405
        %v499 = vunpack.c.h.bf16 %v405
        %v500 = vunpack.c.l.bf16 %v406
        %v501 = vunpack.c.h.bf16 %v406
        %v502 = vunpack.c.l.bf16 %v407
        %v503 = vunpack.c.h.bf16 %v407
        %v504 = vunpack.c.l.bf16 %v408
        %v505 = vunpack.c.h.bf16 %v408
        %v506 = vunpack.c.l.bf16 %v409
        %v507 = vunpack.c.h.bf16 %v409
        %v508 = vunpack.c.l.bf16 %v410
        %v509 = vunpack.c.h.bf16 %v410
        %v510 = vunpack.c.l.bf16 %v411
        %v511 = vunpack.c.h.bf16 %v411
        %v512 = vunpack.c.l.bf16 %v412
        %v513 = vunpack.c.h.bf16 %v412
        %v514 = vunpack.c.l.bf16 %v413
        %v515 = vunpack.c.h.bf16 %v413
        %v516 = vunpack.c.l.bf16 %v414
        %v517 = vunpack.c.h.bf16 %v414
        %v518 = vunpack.c.l.bf16 %v415
        %v519 = vunpack.c.h.bf16 %v415
        %v520 = vunpack.c.l.bf16 %v416
        %v521 = vunpack.c.h.bf16 %v416
        %v522 = vunpack.c.l.bf16 %v417
        %v523 = vunpack.c.h.bf16 %v417
        %v524 = vunpack.c.l.bf16 %v418
        %v525 = vunpack.c.h.bf16 %v418
        %v526 = vunpack.c.l.bf16 %v419
        %v527 = vunpack.c.h.bf16 %v419
        %v528 = vunpack.c.l.bf16 %v420
        %v529 = vunpack.c.h.bf16 %v420
        %v530 = vunpack.c.l.bf16 %v421
        %v531 = vunpack.c.h.bf16 %v421
        %v532 = vunpack.c.l.bf16 %v422
        %v533 = vunpack.c.h.bf16 %v422
        %v534 = vunpack.c.l.bf16 %v423
        %v535 = vunpack.c.h.bf16 %v423
        %v536 = vunpack.c.l.bf16 %v424
        %v537 = vunpack.c.h.bf16 %v424
        %v538 = vunpack.c.l.bf16 %v425
        %v539 = vunpack.c.h.bf16 %v425
        %v540 = vunpack.c.l.bf16 %v426
        %v541 = vunpack.c.h.bf16 %v426
        %v542 = vunpack.c.l.bf16 %v427
        %v543 = vunpack.c.h.bf16 %v427
        %v544 = vunpack.c.l.bf16 %v428
        %v545 = vunpack.c.h.bf16 %v428
        %v546 = vunpack.c.l.bf16 %v429
        %v547 = vunpack.c.h.bf16 %v429
        %v548 = vunpack.c.l.bf16 %v430
        %v549 = vunpack.c.h.bf16 %v430
        %v550 = vunpack.c.l.bf16 %v431
        %v551 = vunpack.c.h.bf16 %v431
        %v552 = vunpack.c.l.bf16 %v432
        %v553 = vunpack.c.h.bf16 %v432
        %v554 = vunpack.c.l.bf16 %v433
        %v555 = vunpack.c.h.bf16 %v433
        %v556 = vunpack.c.l.bf16 %v434
        %v557 = vunpack.c.h.bf16 %v434
        %v558 = vunpack.c.l.bf16 %v435
        %v559 = vunpack.c.h.bf16 %v435
        %v560 = vunpack.c.l.bf16 %v436
        %v561 = vunpack.c.h.bf16 %v436
        %v562 = vunpack.c.l.bf16 %v437
        %v563 = vunpack.c.h.bf16 %v437
        %v564 = vunpack.c.l.bf16 %v438
        %v565 = vunpack.c.h.bf16 %v438
        %v566 = vunpack.c.l.bf16 %v439
        %v567 = vunpack.c.h.bf16 %v439
        %v568 = vld [vmem:[%s2] sm:$0xf]
        %v570 = vlaneseq
        %v571 = vshrl.u32 %v570, 7
        %v572 = vsub.s32 0, %v571
        %v573 = vrot.slane %v568, %v572
        %v574 = vlaneseq
        %v575 = vshrl.u32 %v574, 7
        %v576 = vsub.s32 1, %v575
        %v577 = vrot.slane %v568, %v576
        %v578 = vlaneseq
        %v579 = vshrl.u32 %v578, 7
        %v580 = vsub.s32 2, %v579
        %v581 = vrot.slane %v568, %v580
        %v582 = vlaneseq
        %v583 = vshrl.u32 %v582, 7
        %v584 = vsub.s32 3, %v583
        %v585 = vrot.slane %v568, %v584
        %590 = vmatprep.subr.mxu0 %v441
        %591 = vmatpush1.msra.mxu0 %v440
        %592 = vmatprep.subr.mxu0 %v445
        %593 = vmatpush1.msra.mxu0 %v444
        %594 = vmatprep.subr.mxu0 %v449
        %595 = vmatpush1.msra.mxu0 %v448
        %596 = vmatprep.subr.mxu0 %v453
        %597 = vmatpush1.msra.mxu0 %v452
        %598 = vmatprep.subr.mxu0 %v457
        %599 = vmatpush1.msra.mxu0 %v456
        %600 = vmatprep.subr.mxu0 %v461
        %601 = vmatpush1.msra.mxu0 %v460
        %602 = vmatprep.subr.mxu0 %v465
        %603 = vmatpush1.msra.mxu0 %v464
        %604 = vmatprep.subr.mxu0 %v469
        %605 = vmatpush1.msra.mxu0 %v468
        %606 = vmatprep.subr.mxu0 %v473
        %607 = vmatpush1.msra.mxu0 %v472
        %608 = vmatprep.subr.mxu0 %v477
        %609 = vmatpush1.msra.mxu0 %v476
        %610 = vmatprep.subr.mxu0 %v481
        %611 = vmatpush1.msra.mxu0 %v480
        %612 = vmatprep.subr.mxu0 %v485
        %613 = vmatpush1.msra.mxu0 %v484
        %614 = vmatprep.subr.mxu0 %v489
        %615 = vmatpush1.msra.mxu0 %v488
        %616 = vmatprep.subr.mxu0 %v493
        %617 = vmatpush1.msra.mxu0 %v492
        %618 = vmatprep.subr.mxu0 %v497
        %619 = vmatpush1.msra.mxu0 %v496
        %620 = vmatprep.subr.mxu0 %v501
        %621 = vmatpush1.msra.mxu0 %v500
        %622 = vmatprep.subr.mxu0 %v505
        %623 = vmatpush1.msra.mxu0 %v504
        %624 = vmatprep.subr.mxu0 %v509
        %625 = vmatpush1.msra.mxu0 %v508
        %626 = vmatprep.subr.mxu0 %v513
        %627 = vmatpush1.msra.mxu0 %v512
        %628 = vmatprep.subr.mxu0 %v517
        %629 = vmatpush1.msra.mxu0 %v516
        %630 = vmatprep.subr.mxu0 %v521
        %631 = vmatpush1.msra.mxu0 %v520
        %632 = vmatprep.subr.mxu0 %v525
        %633 = vmatpush1.msra.mxu0 %v524
        %634 = vmatprep.subr.mxu0 %v529
        %635 = vmatpush1.msra.mxu0 %v528
        %636 = vmatprep.subr.mxu0 %v533
        %637 = vmatpush1.msra.mxu0 %v532
        %638 = vmatprep.subr.mxu0 %v537
        %639 = vmatpush1.msra.mxu0 %v536
        %640 = vmatprep.subr.mxu0 %v541
        %641 = vmatpush1.msra.mxu0 %v540
        %642 = vmatprep.subr.mxu0 %v545
        %643 = vmatpush1.msra.mxu0 %v544
        %644 = vmatprep.subr.mxu0 %v549
        %645 = vmatpush1.msra.mxu0 %v548
        %646 = vmatprep.subr.mxu0 %v553
        %647 = vmatpush1.msra.mxu0 %v552
        %648 = vmatprep.subr.mxu0 %v557
        %649 = vmatpush1.msra.mxu0 %v556
        %650 = vmatprep.subr.mxu0 %v561
        %651 = vmatpush1.msra.mxu0 %v560
        %652 = vmatprep.subr.mxu0 %v565
        %653 = vmatpush1.msra.mxu0 %v564
        %654 = vmatprep.mubr.f32.mxu0 %v345
        %655 = vmatmul.mubr.f32.gmra.mrb[0].mxu0 %v344
        %v656 = vpop.f32.mrb[0].mxu0
        %v657 = vadd.f32 %v573, %v656
        %v658 = vpop.f32.mrb[0].mxu0
        %v659 = vadd.f32 %v577, %v658
        %660 = vmatprep.mubr.f32.mxu0 %v347
        %661 = vmatmul.mubr.f32.gmra.mrb[0].mxu0 %v346
        %v662 = vpop.f32.mrb[0].mxu0
        %v663 = vadd.f32 %v573, %v662
        %v664 = vpop.f32.mrb[0].mxu0
        %v665 = vadd.f32 %v577, %v664
        %666 = vmatprep.mubr.f32.mxu0 %v349
        %667 = vmatmul.mubr.f32.gmra.mrb[0].mxu0 %v348
        %v668 = vpop.f32.mrb[0].mxu0
        %v669 = vadd.f32 %v573, %v668
        %v670 = vpop.f32.mrb[0].mxu0
        %v671 = vadd.f32 %v577, %v670
        %672 = vmatprep.mubr.f32.mxu0 %v351
        %673 = vmatmul.mubr.f32.gmra.mrb[0].mxu0 %v350
        %v674 = vpop.f32.mrb[0].mxu0
        %v675 = vadd.f32 %v573, %v674
        %v676 = vpop.f32.mrb[0].mxu0
        %v677 = vadd.f32 %v577, %v676
        %678 = vmatprep.mubr.f32.mxu0 %v353
        %679 = vmatmul.mubr.f32.gmra.mrb[0].mxu0 %v352
        %v680 = vpop.f32.mrb[0].mxu0
        %v681 = vadd.f32 %v573, %v680
        %v682 = vpop.f32.mrb[0].mxu0
        %v683 = vadd.f32 %v577, %v682
        %684 = vmatprep.mubr.f32.mxu0 %v355
        %685 = vmatmul.mubr.f32.gmra.mrb[0].mxu0 %v354
        %v686 = vpop.f32.mrb[0].mxu0
        %v687 = vadd.f32 %v573, %v686
        %v688 = vpop.f32.mrb[0].mxu0
        %v689 = vadd.f32 %v577, %v688
        %690 = vmatprep.mubr.f32.mxu0 %v357
        %691 = vmatmul.mubr.f32.gmra.mrb[0].mxu0 %v356
        %v692 = vpop.f32.mrb[0].mxu0
        %v693 = vadd.f32 %v573, %v692
        %v694 = vpop.f32.mrb[0].mxu0
        %v695 = vadd.f32 %v577, %v694
        %696 = vmatprep.mubr.f32.mxu0 %v359
        %697 = vmatmul.mubr.f32.gmra.mrb[0].mxu0 %v358
        %v698 = vpop.f32.mrb[0].mxu0
        %v699 = vadd.f32 %v573, %v698
        %v700 = vpop.f32.mrb[0].mxu0
        %v701 = vadd.f32 %v577, %v700
        %702 = vmatprep.mubr.f32.mxu0 %v361
        %703 = vmatmul.mubr.f32.gmra.mrb[0].mxu0 %v360
        %v704 = vpop.f32.mrb[0].mxu0
        %v705 = vadd.f32 %v573, %v704
        %v706 = vpop.f32.mrb[0].mxu0
        %v707 = vadd.f32 %v577, %v706
        %708 = vmatprep.mubr.f32.mxu0 %v363
        %709 = vmatmul.mubr.f32.gmra.mrb[0].mxu0 %v362
        %v710 = vpop.f32.mrb[0].mxu0
        %v711 = vadd.f32 %v573, %v710
        %v712 = vpop.f32.mrb[0].mxu0
        %v713 = vadd.f32 %v577, %v712
        %714 = vmatprep.mubr.f32.mxu0 %v365
        %715 = vmatmul.mubr.f32.gmra.mrb[0].mxu0 %v364
        %v716 = vpop.f32.mrb[0].mxu0
        %v717 = vadd.f32 %v573, %v716
        %v718 = vpop.f32.mrb[0].mxu0
        %v719 = vadd.f32 %v577, %v718
        %720 = vmatprep.mubr.f32.mxu0 %v367
        %721 = vmatmul.mubr.f32.gmra.mrb[0].mxu0 %v366
        %v722 = vpop.f32.mrb[0].mxu0
        %v723 = vadd.f32 %v573, %v722
        %v724 = vpop.f32.mrb[0].mxu0
        %v725 = vadd.f32 %v577, %v724
        %726 = vmatprep.mubr.f32.mxu0 %v369
        %727 = vmatmul.mubr.f32.gmra.mrb[0].mxu0 %v368
        %v728 = vpop.f32.mrb[0].mxu0
        %v729 = vadd.f32 %v573, %v728
        %v730 = vpop.f32.mrb[0].mxu0
        %v731 = vadd.f32 %v577, %v730
        %732 = vmatprep.mubr.f32.mxu0 %v371
        %733 = vmatmul.mubr.f32.gmra.mrb[0].mxu0 %v370
        %v734 = vpop.f32.mrb[0].mxu0
        %v735 = vadd.f32 %v573, %v734
        %v736 = vpop.f32.mrb[0].mxu0
        %v737 = vadd.f32 %v577, %v736
        %738 = vmatprep.mubr.f32.mxu0 %v373
        %739 = vmatmul.mubr.f32.gmra.mrb[0].mxu0 %v372
        %v740 = vpop.f32.mrb[0].mxu0
        %v741 = vadd.f32 %v573, %v740
        %v742 = vpop.f32.mrb[0].mxu0
        %v743 = vadd.f32 %v577, %v742
        %744 = vmatprep.mubr.f32.mxu0 %v375
        %745 = vmatmul.mubr.f32.gmra.mrb[0].mxu0 %v374
        %v746 = vpop.f32.mrb[0].mxu0
        %v747 = vadd.f32 %v573, %v746
        %v748 = vpop.f32.mrb[0].mxu0
        %v749 = vadd.f32 %v577, %v748
        %750 = vdwg.mxu0
        %751 = vmatprep.subr.mxu0 %v443
        %752 = vmatpush1.msra.mxu0 %v442
        %753 = vmatprep.subr.mxu0 %v447
        %754 = vmatpush1.msra.mxu0 %v446
        %755 = vmatprep.subr.mxu0 %v451
        %756 = vmatpush1.msra.mxu0 %v450
        %757 = vmatprep.subr.mxu0 %v455
        %758 = vmatpush1.msra.mxu0 %v454
        %759 = vmatprep.subr.mxu0 %v459
        %760 = vmatpush1.msra.mxu0 %v458
        %761 = vmatprep.subr.mxu0 %v463
        %762 = vmatpush1.msra.mxu0 %v462
        %763 = vmatprep.subr.mxu0 %v467
        %764 = vmatpush1.msra.mxu0 %v466
        %765 = vmatprep.subr.mxu0 %v471
        %766 = vmatpush1.msra.mxu0 %v470
        %767 = vmatprep.subr.mxu0 %v475
        %768 = vmatpush1.msra.mxu0 %v474
        %769 = vmatprep.subr.mxu0 %v479
        %770 = vmatpush1.msra.mxu0 %v478
        %771 = vmatprep.subr.mxu0 %v483
        %772 = vmatpush1.msra.mxu0 %v482
        %773 = vmatprep.subr.mxu0 %v487
        %774 = vmatpush1.msra.mxu0 %v486
        %775 = vmatprep.subr.mxu0 %v491
        %776 = vmatpush1.msra.mxu0 %v490
        %777 = vmatprep.subr.mxu0 %v495
        %778 = vmatpush1.msra.mxu0 %v494
        %779 = vmatprep.subr.mxu0 %v499
        %780 = vmatpush1.msra.mxu0 %v498
        %781 = vmatprep.subr.mxu0 %v503
        %782 = vmatpush1.msra.mxu0 %v502
        %783 = vmatprep.subr.mxu0 %v507
        %784 = vmatpush1.msra.mxu0 %v506
        %785 = vmatprep.subr.mxu0 %v511
        %786 = vmatpush1.msra.mxu0 %v510
        %787 = vmatprep.subr.mxu0 %v515
        %788 = vmatpush1.msra.mxu0 %v514
        %789 = vmatprep.subr.mxu0 %v519
        %790 = vmatpush1.msra.mxu0 %v518
        %791 = vmatprep.subr.mxu0 %v523
        %792 = vmatpush1.msra.mxu0 %v522
        %793 = vmatprep.subr.mxu0 %v527
        %794 = vmatpush1.msra.mxu0 %v526
        %795 = vmatprep.subr.mxu0 %v531
        %796 = vmatpush1.msra.mxu0 %v530
        %797 = vmatprep.subr.mxu0 %v535
        %798 = vmatpush1.msra.mxu0 %v534
        %799 = vmatprep.subr.mxu0 %v539
        %800 = vmatpush1.msra.mxu0 %v538
        %801 = vmatprep.subr.mxu0 %v543
        %802 = vmatpush1.msra.mxu0 %v542
        %803 = vmatprep.subr.mxu0 %v547
        %804 = vmatpush1.msra.mxu0 %v546
        %805 = vmatprep.subr.mxu0 %v551
        %806 = vmatpush1.msra.mxu0 %v550
        %807 = vmatprep.subr.mxu0 %v555
        %808 = vmatpush1.msra.mxu0 %v554
        %809 = vmatprep.subr.mxu0 %v559
        %810 = vmatpush1.msra.mxu0 %v558
        %811 = vmatprep.subr.mxu0 %v563
        %812 = vmatpush1.msra.mxu0 %v562
        %813 = vmatprep.subr.mxu0 %v567
        %814 = vmatpush1.msra.mxu0 %v566
        %815 = vmatprep.mubr.f32.mxu0 %v345
        %816 = vmatmul.mubr.f32.gmra.mrb[0].mxu0 %v344
        %v817 = vpop.f32.mrb[0].mxu0
        %v818 = vadd.f32 %v581, %v817
        %v819 = vpop.f32.mrb[0].mxu0
        %v820 = vadd.f32 %v585, %v819
        %821 = vmatprep.mubr.f32.mxu0 %v347
        %822 = vmatmul.mubr.f32.gmra.mrb[0].mxu0 %v346
        %v823 = vpop.f32.mrb[0].mxu0
        %v824 = vadd.f32 %v581, %v823
        %v825 = vpop.f32.mrb[0].mxu0
        %v826 = vadd.f32 %v585, %v825
        %827 = vmatprep.mubr.f32.mxu0 %v349
        %828 = vmatmul.mubr.f32.gmra.mrb[0].mxu0 %v348
        %v829 = vpop.f32.mrb[0].mxu0
        %v830 = vadd.f32 %v581, %v829
        %v831 = vpop.f32.mrb[0].mxu0
        %v832 = vadd.f32 %v585, %v831
        %833 = vmatprep.mubr.f32.mxu0 %v351
        %834 = vmatmul.mubr.f32.gmra.mrb[0].mxu0 %v350
        %v835 = vpop.f32.mrb[0].mxu0
        %v836 = vadd.f32 %v581, %v835
        %v837 = vpop.f32.mrb[0].mxu0
        %v838 = vadd.f32 %v585, %v837
        %839 = vmatprep.mubr.f32.mxu0 %v353
        %840 = vmatmul.mubr.f32.gmra.mrb[0].mxu0 %v352
        %v841 = vpop.f32.mrb[0].mxu0
        %v842 = vadd.f32 %v581, %v841
        %v843 = vpop.f32.mrb[0].mxu0
        %v844 = vadd.f32 %v585, %v843
        %845 = vmatprep.mubr.f32.mxu0 %v355
        %846 = vmatmul.mubr.f32.gmra.mrb[0].mxu0 %v354
        %v847 = vpop.f32.mrb[0].mxu0
        %v848 = vadd.f32 %v581, %v847
        %v849 = vpop.f32.mrb[0].mxu0
        %v850 = vadd.f32 %v585, %v849
        %851 = vmatprep.mubr.f32.mxu0 %v357
        %852 = vmatmul.mubr.f32.gmra.mrb[0].mxu0 %v356
        %v853 = vpop.f32.mrb[0].mxu0
        %v854 = vadd.f32 %v581, %v853
        %v855 = vpop.f32.mrb[0].mxu0
        %v856 = vadd.f32 %v585, %v855
        %857 = vmatprep.mubr.f32.mxu0 %v359
        %858 = vmatmul.mubr.f32.gmra.mrb[0].mxu0 %v358
        %v859 = vpop.f32.mrb[0].mxu0
        %v860 = vadd.f32 %v581, %v859
        %v861 = vpop.f32.mrb[0].mxu0
        %v862 = vadd.f32 %v585, %v861
        %863 = vmatprep.mubr.f32.mxu0 %v361
        %864 = vmatmul.mubr.f32.gmra.mrb[0].mxu0 %v360
        %v865 = vpop.f32.mrb[0].mxu0
        %v866 = vadd.f32 %v581, %v865
        %v867 = vpop.f32.mrb[0].mxu0
        %v868 = vadd.f32 %v585, %v867
        %869 = vmatprep.mubr.f32.mxu0 %v363
        %870 = vmatmul.mubr.f32.gmra.mrb[0].mxu0 %v362
        %v871 = vpop.f32.mrb[0].mxu0
        %v872 = vadd.f32 %v581, %v871
        %v873 = vpop.f32.mrb[0].mxu0
        %v874 = vadd.f32 %v585, %v873
        %875 = vmatprep.mubr.f32.mxu0 %v365
        %876 = vmatmul.mubr.f32.gmra.mrb[0].mxu0 %v364
        %v877 = vpop.f32.mrb[0].mxu0
        %v878 = vadd.f32 %v581, %v877
        %v879 = vpop.f32.mrb[0].mxu0
        %v880 = vadd.f32 %v585, %v879
        %881 = vmatprep.mubr.f32.mxu0 %v367
        %882 = vmatmul.mubr.f32.gmra.mrb[0].mxu0 %v366
        %v883 = vpop.f32.mrb[0].mxu0
        %v884 = vadd.f32 %v581, %v883
        %v885 = vpop.f32.mrb[0].mxu0
        %v886 = vadd.f32 %v585, %v885
        %887 = vmatprep.mubr.f32.mxu0 %v369
        %888 = vmatmul.mubr.f32.gmra.mrb[0].mxu0 %v368
        %v889 = vpop.f32.mrb[0].mxu0
        %v890 = vadd.f32 %v581, %v889
        %v891 = vpop.f32.mrb[0].mxu0
        %v892 = vadd.f32 %v585, %v891
        %893 = vmatprep.mubr.f32.mxu0 %v371
        %894 = vmatmul.mubr.f32.gmra.mrb[0].mxu0 %v370
        %v895 = vpop.f32.mrb[0].mxu0
        %v896 = vadd.f32 %v581, %v895
        %v897 = vpop.f32.mrb[0].mxu0
        %v898 = vadd.f32 %v585, %v897
        %899 = vmatprep.mubr.f32.mxu0 %v373
        %900 = vmatmul.mubr.f32.gmra.mrb[0].mxu0 %v372
        %v901 = vpop.f32.mrb[0].mxu0
        %v902 = vadd.f32 %v581, %v901
        %v903 = vpop.f32.mrb[0].mxu0
        %v904 = vadd.f32 %v585, %v903
        %905 = vmatprep.mubr.f32.mxu0 %v375
        %906 = vmatmul.mubr.f32.gmra.mrb[0].mxu0 %v374
        %v907 = vpop.f32.mrb[0].mxu0
        %v908 = vadd.f32 %v581, %v907
        %v909 = vpop.f32.mrb[0].mxu0
        %v910 = vadd.f32 %v585, %v909
        %911 = vdwg.mxu0
        %v912 = vmax.f32 %v657, %v659
        %v913 = vmax.f32 %v663, %v665
        %v914 = vmax.f32 %v669, %v671
        %v915 = vmax.f32 %v675, %v677
        %v916 = vmax.f32 %v681, %v683
        %v917 = vmax.f32 %v687, %v689
        %v918 = vmax.f32 %v693, %v695
        %v919 = vmax.f32 %v699, %v701
        %v920 = vmax.f32 %v705, %v707
        %v921 = vmax.f32 %v711, %v713
        %v922 = vmax.f32 %v717, %v719
        %v923 = vmax.f32 %v723, %v725
        %v924 = vmax.f32 %v729, %v731
        %v925 = vmax.f32 %v735, %v737
        %v926 = vmax.f32 %v741, %v743
        %v927 = vmax.f32 %v747, %v749
        %v928 = vmax.f32 %v818, %v820
        %v929 = vmax.f32 %v824, %v826
        %v930 = vmax.f32 %v830, %v832
        %v931 = vmax.f32 %v836, %v838
        %v932 = vmax.f32 %v842, %v844
        %v933 = vmax.f32 %v848, %v850
        %v934 = vmax.f32 %v854, %v856
        %v935 = vmax.f32 %v860, %v862
        %v936 = vmax.f32 %v866, %v868
        %v937 = vmax.f32 %v872, %v874
        %v938 = vmax.f32 %v878, %v880
        %v939 = vmax.f32 %v884, %v886
        %v940 = vmax.f32 %v890, %v892
        %v941 = vmax.f32 %v896, %v898
        %v942 = vmax.f32 %v902, %v904
        %v943 = vmax.f32 %v908, %v910
        %v944 = vmax.f32 %v912, %v928
        %v945 = vmax.f32 %v913, %v929
        %v946 = vmax.f32 %v914, %v930
        %v947 = vmax.f32 %v915, %v931
        %v948 = vmax.f32 %v916, %v932
        %v949 = vmax.f32 %v917, %v933
        %v950 = vmax.f32 %v918, %v934
        %v951 = vmax.f32 %v919, %v935
        %v952 = vmax.f32 %v920, %v936
        %v953 = vmax.f32 %v921, %v937
        %v954 = vmax.f32 %v922, %v938
        %v955 = vmax.f32 %v923, %v939
        %v956 = vmax.f32 %v924, %v940
        %v957 = vmax.f32 %v925, %v941
        %v958 = vmax.f32 %v926, %v942
        %v959 = vmax.f32 %v927, %v943
        %v960 = vmax.f32 %v944, 0.0
        %v961 = vmax.f32 %v945, 0.0
        %v962 = vmax.f32 %v946, 0.0
        %v963 = vmax.f32 %v947, 0.0
        %v964 = vmax.f32 %v948, 0.0
        %v965 = vmax.f32 %v949, 0.0
        %v966 = vmax.f32 %v950, 0.0
        %v967 = vmax.f32 %v951, 0.0
        %v968 = vmax.f32 %v952, 0.0
        %v969 = vmax.f32 %v953, 0.0
        %v970 = vmax.f32 %v954, 0.0
        %v971 = vmax.f32 %v955, 0.0
        %v972 = vmax.f32 %v956, 0.0
        %v973 = vmax.f32 %v957, 0.0
        %v974 = vmax.f32 %v958, 0.0
        %v975 = vmax.f32 %v959, 0.0
        %v976 = vld [vmem:[#allocation7] sm:$0xff]
        %v977 = vld [vmem:[#allocation7 + $0x8] sm:$0xff]
        %v978 = vld [vmem:[#allocation7 + $0x10] sm:$0xff]
        %v979 = vld [vmem:[#allocation7 + $0x18] sm:$0xff]
        %v980 = vld [vmem:[#allocation7 + $0x20] sm:$0xff]
        %v981 = vld [vmem:[#allocation7 + $0x28] sm:$0xff]
        %v982 = vld [vmem:[#allocation7 + $0x30] sm:$0xff]
        %v983 = vld [vmem:[#allocation7 + $0x38] sm:$0xff]
        %v984 = vld [vmem:[#allocation7 + $0x40] sm:$0xff]
        %v985 = vld [vmem:[#allocation7 + $0x48] sm:$0xff]
        %v986 = vld [vmem:[#allocation7 + $0x50] sm:$0xff]
        %v987 = vld [vmem:[#allocation7 + $0x58] sm:$0xff]
        %v988 = vld [vmem:[#allocation7 + $0x60] sm:$0xff]
        %v989 = vld [vmem:[#allocation7 + $0x68] sm:$0xff]
        %v990 = vld [vmem:[#allocation7 + $0x70] sm:$0xff]
        %v991 = vld [vmem:[#allocation7 + $0x78] sm:$0xff]
        %v992 = vld [vmem:[#allocation7 + $0x80] sm:$0xff]
        %v993 = vld [vmem:[#allocation7 + $0x88] sm:$0xff]
        %v994 = vld [vmem:[#allocation7 + $0x90] sm:$0xff]
        %v995 = vld [vmem:[#allocation7 + $0x98] sm:$0xff]
        %v996 = vld [vmem:[#allocation7 + $0xa0] sm:$0xff]
        %v997 = vld [vmem:[#allocation7 + $0xa8] sm:$0xff]
        %v998 = vld [vmem:[#allocation7 + $0xb0] sm:$0xff]
        %v999 = vld [vmem:[#allocation7 + $0xb8] sm:$0xff]
        %v1000 = vld [vmem:[#allocation7 + $0xc0] sm:$0xff]
        %v1001 = vld [vmem:[#allocation7 + $0xc8] sm:$0xff]
        %v1002 = vld [vmem:[#allocation7 + $0xd0] sm:$0xff]
        %v1003 = vld [vmem:[#allocation7 + $0xd8] sm:$0xff]
        %v1004 = vld [vmem:[#allocation7 + $0xe0] sm:$0xff]
        %v1005 = vld [vmem:[#allocation7 + $0xe8] sm:$0xff]
        %v1006 = vld [vmem:[#allocation7 + $0xf0] sm:$0xff]
        %v1007 = vld [vmem:[#allocation7 + $0xf8] sm:$0xff]
        %v1008 = vunpack.c.l.bf16 %v976
        %v1009 = vunpack.c.h.bf16 %v976
        %v1010 = vunpack.c.l.bf16 %v977
        %v1011 = vunpack.c.h.bf16 %v977
        %v1012 = vunpack.c.l.bf16 %v978
        %v1013 = vunpack.c.h.bf16 %v978
        %v1014 = vunpack.c.l.bf16 %v979
        %v1015 = vunpack.c.h.bf16 %v979
        %v1016 = vunpack.c.l.bf16 %v980
        %v1017 = vunpack.c.h.bf16 %v980
        %v1018 = vunpack.c.l.bf16 %v981
        %v1019 = vunpack.c.h.bf16 %v981
        %v1020 = vunpack.c.l.bf16 %v982
        %v1021 = vunpack.c.h.bf16 %v982
        %v1022 = vunpack.c.l.bf16 %v983
        %v1023 = vunpack.c.h.bf16 %v983
        %v1024 = vunpack.c.l.bf16 %v984
        %v1025 = vunpack.c.h.bf16 %v984
        %v1026 = vunpack.c.l.bf16 %v985
        %v1027 = vunpack.c.h.bf16 %v985
        %v1028 = vunpack.c.l.bf16 %v986
        %v1029 = vunpack.c.h.bf16 %v986
        %v1030 = vunpack.c.l.bf16 %v987
        %v1031 = vunpack.c.h.bf16 %v987
        %v1032 = vunpack.c.l.bf16 %v988
        %v1033 = vunpack.c.h.bf16 %v988
        %v1034 = vunpack.c.l.bf16 %v989
        %v1035 = vunpack.c.h.bf16 %v989
        %v1036 = vunpack.c.l.bf16 %v990
        %v1037 = vunpack.c.h.bf16 %v990
        %v1038 = vunpack.c.l.bf16 %v991
        %v1039 = vunpack.c.h.bf16 %v991
        %v1040 = vunpack.c.l.bf16 %v992
        %v1041 = vunpack.c.h.bf16 %v992
        %v1042 = vunpack.c.l.bf16 %v993
        %v1043 = vunpack.c.h.bf16 %v993
        %v1044 = vunpack.c.l.bf16 %v994
        %v1045 = vunpack.c.h.bf16 %v994
        %v1046 = vunpack.c.l.bf16 %v995
        %v1047 = vunpack.c.h.bf16 %v995
        %v1048 = vunpack.c.l.bf16 %v996
        %v1049 = vunpack.c.h.bf16 %v996
        %v1050 = vunpack.c.l.bf16 %v997
        %v1051 = vunpack.c.h.bf16 %v997
        %v1052 = vunpack.c.l.bf16 %v998
        %v1053 = vunpack.c.h.bf16 %v998
        %v1054 = vunpack.c.l.bf16 %v999
        %v1055 = vunpack.c.h.bf16 %v999
        %v1056 = vunpack.c.l.bf16 %v1000
        %v1057 = vunpack.c.h.bf16 %v1000
        %v1058 = vunpack.c.l.bf16 %v1001
        %v1059 = vunpack.c.h.bf16 %v1001
        %v1060 = vunpack.c.l.bf16 %v1002
        %v1061 = vunpack.c.h.bf16 %v1002
        %v1062 = vunpack.c.l.bf16 %v1003
        %v1063 = vunpack.c.h.bf16 %v1003
        %v1064 = vunpack.c.l.bf16 %v1004
        %v1065 = vunpack.c.h.bf16 %v1004
        %v1066 = vunpack.c.l.bf16 %v1005
        %v1067 = vunpack.c.h.bf16 %v1005
        %v1068 = vunpack.c.l.bf16 %v1006
        %v1069 = vunpack.c.h.bf16 %v1006
        %v1070 = vunpack.c.l.bf16 %v1007
        %v1071 = vunpack.c.h.bf16 %v1007
        %v1072 = vld [vmem:[%s4] sm:$0xf]
        %v1074 = vlaneseq
        %v1075 = vshrl.u32 %v1074, 7
        %v1076 = vsub.s32 0, %v1075
        %v1077 = vrot.slane %v1072, %v1076
        %v1078 = vlaneseq
        %v1079 = vshrl.u32 %v1078, 7
        %v1080 = vsub.s32 1, %v1079
        %v1081 = vrot.slane %v1072, %v1080
        %v1082 = vlaneseq
        %v1083 = vshrl.u32 %v1082, 7
        %v1084 = vsub.s32 2, %v1083
        %v1085 = vrot.slane %v1072, %v1084
        %v1086 = vlaneseq
        %v1087 = vshrl.u32 %v1086, 7
        %v1088 = vsub.s32 3, %v1087
        %v1089 = vrot.slane %v1072, %v1088
        %1094 = vmatprep.subr.mxu0 %v1009
        %1095 = vmatpush1.msra.mxu0 %v1008
        %1096 = vmatprep.subr.mxu0 %v1013
        %1097 = vmatpush1.msra.mxu0 %v1012
        %1098 = vmatprep.subr.mxu0 %v1017
        %1099 = vmatpush1.msra.mxu0 %v1016
        %1100 = vmatprep.subr.mxu0 %v1021
        %1101 = vmatpush1.msra.mxu0 %v1020
        %1102 = vmatprep.subr.mxu0 %v1025
        %1103 = vmatpush1.msra.mxu0 %v1024
        %1104 = vmatprep.subr.mxu0 %v1029
        %1105 = vmatpush1.msra.mxu0 %v1028
        %1106 = vmatprep.subr.mxu0 %v1033
        %1107 = vmatpush1.msra.mxu0 %v1032
        %1108 = vmatprep.subr.mxu0 %v1037
        %1109 = vmatpush1.msra.mxu0 %v1036
        %1110 = vmatprep.subr.mxu0 %v1041
        %1111 = vmatpush1.msra.mxu0 %v1040
        %1112 = vmatprep.subr.mxu0 %v1045
        %1113 = vmatpush1.msra.mxu0 %v1044
        %1114 = vmatprep.subr.mxu0 %v1049
        %1115 = vmatpush1.msra.mxu0 %v1048
        %1116 = vmatprep.subr.mxu0 %v1053
        %1117 = vmatpush1.msra.mxu0 %v1052
        %1118 = vmatprep.subr.mxu0 %v1057
        %1119 = vmatpush1.msra.mxu0 %v1056
        %1120 = vmatprep.subr.mxu0 %v1061
        %1121 = vmatpush1.msra.mxu0 %v1060
        %1122 = vmatprep.subr.mxu0 %v1065
        %1123 = vmatpush1.msra.mxu0 %v1064
        %1124 = vmatprep.subr.mxu0 %v1069
        %1125 = vmatpush1.msra.mxu0 %v1068
        %1126 = vmatprep.subr.mxu0 0.0
        %1127 = vmatpush1.msra.mxu0 0.0
        %1128 = vmatprep.subr.mxu0 0.0
        %1129 = vmatpush1.msra.mxu0 0.0
        %1130 = vmatprep.subr.mxu0 0.0
        %1131 = vmatpush1.msra.mxu0 0.0
        %1132 = vmatprep.subr.mxu0 0.0
        %1133 = vmatpush1.msra.mxu0 0.0
        %1134 = vmatprep.subr.mxu0 0.0
        %1135 = vmatpush1.msra.mxu0 0.0
        %1136 = vmatprep.subr.mxu0 0.0
        %1137 = vmatpush1.msra.mxu0 0.0
        %1138 = vmatprep.subr.mxu0 0.0
        %1139 = vmatpush1.msra.mxu0 0.0
        %1140 = vmatprep.subr.mxu0 0.0
        %1141 = vmatpush1.msra.mxu0 0.0
        %1142 = vmatprep.subr.mxu0 0.0
        %1143 = vmatpush1.msra.mxu0 0.0
        %1144 = vmatprep.subr.mxu0 0.0
        %1145 = vmatpush1.msra.mxu0 0.0
        %1146 = vmatprep.subr.mxu0 0.0
        %1147 = vmatpush1.msra.mxu0 0.0
        %1148 = vmatprep.subr.mxu0 0.0
        %1149 = vmatpush1.msra.mxu0 0.0
        %1150 = vmatprep.subr.mxu0 0.0
        %1151 = vmatpush1.msra.mxu0 0.0
        %1152 = vmatprep.subr.mxu0 0.0
        %1153 = vmatpush1.msra.mxu0 0.0
        %1154 = vmatprep.subr.mxu0 0.0
        %1155 = vmatpush1.msra.mxu0 0.0
        %1156 = vmatprep.subr.mxu0 0.0
        %1157 = vmatpush1.msra.mxu0 0.0
        %1158 = vmatprep.mubr.f32.mxu0 0.0
        %1159 = vmatmul.mubr.f32.gmra.mrb[0].mxu0 %v960
        %v1160 = vpop.f32.mrb[0].mxu0
        %v1161 = vadd.f32 %v1077, %v1160
        %v1162 = vpop.f32.mrb[0].mxu0
        %v1163 = vadd.f32 %v1081, %v1162
        %1164 = vmatprep.mubr.f32.mxu0 0.0
        %1165 = vmatmul.mubr.f32.gmra.mrb[0].mxu0 %v961
        %v1166 = vpop.f32.mrb[0].mxu0
        %v1167 = vadd.f32 %v1077, %v1166
        %v1168 = vpop.f32.mrb[0].mxu0
        %v1169 = vadd.f32 %v1081, %v1168
        %1170 = vmatprep.mubr.f32.mxu0 0.0
        %1171 = vmatmul.mubr.f32.gmra.mrb[0].mxu0 %v962
        %v1172 = vpop.f32.mrb[0].mxu0
        %v1173 = vadd.f32 %v1077, %v1172
        %v1174 = vpop.f32.mrb[0].mxu0
        %v1175 = vadd.f32 %v1081, %v1174
        %1176 = vmatprep.mubr.f32.mxu0 0.0
        %1177 = vmatmul.mubr.f32.gmra.mrb[0].mxu0 %v963
        %v1178 = vpop.f32.mrb[0].mxu0
        %v1179 = vadd.f32 %v1077, %v1178
        %v1180 = vpop.f32.mrb[0].mxu0
        %v1181 = vadd.f32 %v1081, %v1180
        %1182 = vmatprep.mubr.f32.mxu0 0.0
        %1183 = vmatmul.mubr.f32.gmra.mrb[0].mxu0 %v964
        %v1184 = vpop.f32.mrb[0].mxu0
        %v1185 = vadd.f32 %v1077, %v1184
        %v1186 = vpop.f32.mrb[0].mxu0
        %v1187 = vadd.f32 %v1081, %v1186
        %1188 = vmatprep.mubr.f32.mxu0 0.0
        %1189 = vmatmul.mubr.f32.gmra.mrb[0].mxu0 %v965
        %v1190 = vpop.f32.mrb[0].mxu0
        %v1191 = vadd.f32 %v1077, %v1190
        %v1192 = vpop.f32.mrb[0].mxu0
        %v1193 = vadd.f32 %v1081, %v1192
        %1194 = vmatprep.mubr.f32.mxu0 0.0
        %1195 = vmatmul.mubr.f32.gmra.mrb[0].mxu0 %v966
        %v1196 = vpop.f32.mrb[0].mxu0
        %v1197 = vadd.f32 %v1077, %v1196
        %v1198 = vpop.f32.mrb[0].mxu0
        %v1199 = vadd.f32 %v1081, %v1198
        %1200 = vmatprep.mubr.f32.mxu0 0.0
        %1201 = vmatmul.mubr.f32.gmra.mrb[0].mxu0 %v967
        %v1202 = vpop.f32.mrb[0].mxu0
        %v1203 = vadd.f32 %v1077, %v1202
        %v1204 = vpop.f32.mrb[0].mxu0
        %v1205 = vadd.f32 %v1081, %v1204
        %1206 = vmatprep.mubr.f32.mxu0 0.0
        %1207 = vmatmul.mubr.f32.gmra.mrb[0].mxu0 %v968
        %v1208 = vpop.f32.mrb[0].mxu0
        %v1209 = vadd.f32 %v1077, %v1208
        %v1210 = vpop.f32.mrb[0].mxu0
        %v1211 = vadd.f32 %v1081, %v1210
        %1212 = vmatprep.mubr.f32.mxu0 0.0
        %1213 = vmatmul.mubr.f32.gmra.mrb[0].mxu0 %v969
        %v1214 = vpop.f32.mrb[0].mxu0
        %v1215 = vadd.f32 %v1077, %v1214
        %v1216 = vpop.f32.mrb[0].mxu0
        %v1217 = vadd.f32 %v1081, %v1216
        %1218 = vmatprep.mubr.f32.mxu0 0.0
        %1219 = vmatmul.mubr.f32.gmra.mrb[0].mxu0 %v970
        %v1220 = vpop.f32.mrb[0].mxu0
        %v1221 = vadd.f32 %v1077, %v1220
        %v1222 = vpop.f32.mrb[0].mxu0
        %v1223 = vadd.f32 %v1081, %v1222
        %1224 = vmatprep.mubr.f32.mxu0 0.0
        %1225 = vmatmul.mubr.f32.gmra.mrb[0].mxu0 %v971
        %v1226 = vpop.f32.mrb[0].mxu0
        %v1227 = vadd.f32 %v1077, %v1226
        %v1228 = vpop.f32.mrb[0].mxu0
        %v1229 = vadd.f32 %v1081, %v1228
        %1230 = vmatprep.mubr.f32.mxu0 0.0
        %1231 = vmatmul.mubr.f32.gmra.mrb[0].mxu0 %v972
        %v1232 = vpop.f32.mrb[0].mxu0
        %v1233 = vadd.f32 %v1077, %v1232
        %v1234 = vpop.f32.mrb[0].mxu0
        %v1235 = vadd.f32 %v1081, %v1234
        %1236 = vmatprep.mubr.f32.mxu0 0.0
        %1237 = vmatmul.mubr.f32.gmra.mrb[0].mxu0 %v973
        %v1238 = vpop.f32.mrb[0].mxu0
        %v1239 = vadd.f32 %v1077, %v1238
        %v1240 = vpop.f32.mrb[0].mxu0
        %v1241 = vadd.f32 %v1081, %v1240
        %1242 = vmatprep.mubr.f32.mxu0 0.0
        %1243 = vmatmul.mubr.f32.gmra.mrb[0].mxu0 %v974
        %v1244 = vpop.f32.mrb[0].mxu0
        %v1245 = vadd.f32 %v1077, %v1244
        %v1246 = vpop.f32.mrb[0].mxu0
        %v1247 = vadd.f32 %v1081, %v1246
        %1248 = vmatprep.mubr.f32.mxu0 0.0
        %1249 = vmatmul.mubr.f32.gmra.mrb[0].mxu0 %v975
        %v1250 = vpop.f32.mrb[0].mxu0
        %v1251 = vadd.f32 %v1077, %v1250
        %v1252 = vpop.f32.mrb[0].mxu0
        %v1253 = vadd.f32 %v1081, %v1252
        %1254 = vdwg.mxu0
        %1255 = vmatprep.subr.mxu0 %v1011
        %1256 = vmatpush1.msra.mxu0 %v1010
        %1257 = vmatprep.subr.mxu0 %v1015
        %1258 = vmatpush1.msra.mxu0 %v1014
        %1259 = vmatprep.subr.mxu0 %v1019
        %1260 = vmatpush1.msra.mxu0 %v1018
        %1261 = vmatprep.subr.mxu0 %v1023
        %1262 = vmatpush1.msra.mxu0 %v1022
        %1263 = vmatprep.subr.mxu0 %v1027
        %1264 = vmatpush1.msra.mxu0 %v1026
        %1265 = vmatprep.subr.mxu0 %v1031
        %1266 = vmatpush1.msra.mxu0 %v1030
        %1267 = vmatprep.subr.mxu0 %v1035
        %1268 = vmatpush1.msra.mxu0 %v1034
        %1269 = vmatprep.subr.mxu0 %v1039
        %1270 = vmatpush1.msra.mxu0 %v1038
        %1271 = vmatprep.subr.mxu0 %v1043
        %1272 = vmatpush1.msra.mxu0 %v1042
        %1273 = vmatprep.subr.mxu0 %v1047
        %1274 = vmatpush1.msra.mxu0 %v1046
        %1275 = vmatprep.subr.mxu0 %v1051
        %1276 = vmatpush1.msra.mxu0 %v1050
        %1277 = vmatprep.subr.mxu0 %v1055
        %1278 = vmatpush1.msra.mxu0 %v1054
        %1279 = vmatprep.subr.mxu0 %v1059
        %1280 = vmatpush1.msra.mxu0 %v1058
        %1281 = vmatprep.subr.mxu0 %v1063
        %1282 = vmatpush1.msra.mxu0 %v1062
        %1283 = vmatprep.subr.mxu0 %v1067
        %1284 = vmatpush1.msra.mxu0 %v1066
        %1285 = vmatprep.subr.mxu0 %v1071
        %1286 = vmatpush1.msra.mxu0 %v1070
        %1287 = vmatprep.subr.mxu0 0.0
        %1288 = vmatpush1.msra.mxu0 0.0
        %1289 = vmatprep.subr.mxu0 0.0
        %1290 = vmatpush1.msra.mxu0 0.0
        %1291 = vmatprep.subr.mxu0 0.0
        %1292 = vmatpush1.msra.mxu0 0.0
        %1293 = vmatprep.subr.mxu0 0.0
        %1294 = vmatpush1.msra.mxu0 0.0
        %1295 = vmatprep.subr.mxu0 0.0
        %1296 = vmatpush1.msra.mxu0 0.0
        %1297 = vmatprep.subr.mxu0 0.0
        %1298 = vmatpush1.msra.mxu0 0.0
        %1299 = vmatprep.subr.mxu0 0.0
        %1300 = vmatpush1.msra.mxu0 0.0
        %1301 = vmatprep.subr.mxu0 0.0
        %1302 = vmatpush1.msra.mxu0 0.0
        %1303 = vmatprep.subr.mxu0 0.0
        %1304 = vmatpush1.msra.mxu0 0.0
        %1305 = vmatprep.subr.mxu0 0.0
        %1306 = vmatpush1.msra.mxu0 0.0
        %1307 = vmatprep.subr.mxu0 0.0
        %1308 = vmatpush1.msra.mxu0 0.0
        %1309 = vmatprep.subr.mxu0 0.0
        %1310 = vmatpush1.msra.mxu0 0.0
        %1311 = vmatprep.subr.mxu0 0.0
        %1312 = vmatpush1.msra.mxu0 0.0
        %1313 = vmatprep.subr.mxu0 0.0
        %1314 = vmatpush1.msra.mxu0 0.0
        %1315 = vmatprep.subr.mxu0 0.0
        %1316 = vmatpush1.msra.mxu0 0.0
        %1317 = vmatprep.subr.mxu0 0.0
        %1318 = vmatpush1.msra.mxu0 0.0
        %1319 = vmatprep.mubr.f32.mxu0 0.0
        %1320 = vmatmul.mubr.f32.gmra.mrb[0].mxu0 %v960
        %v1321 = vpop.f32.mrb[0].mxu0
        %v1322 = vadd.f32 %v1085, %v1321
        %v1323 = vpop.f32.mrb[0].mxu0
        %v1324 = vadd.f32 %v1089, %v1323
        %1325 = vmatprep.mubr.f32.mxu0 0.0
        %1326 = vmatmul.mubr.f32.gmra.mrb[0].mxu0 %v961
        %v1327 = vpop.f32.mrb[0].mxu0
        %v1328 = vadd.f32 %v1085, %v1327
        %v1329 = vpop.f32.mrb[0].mxu0
        %v1330 = vadd.f32 %v1089, %v1329
        %1331 = vmatprep.mubr.f32.mxu0 0.0
        %1332 = vmatmul.mubr.f32.gmra.mrb[0].mxu0 %v962
        %v1333 = vpop.f32.mrb[0].mxu0
        %v1334 = vadd.f32 %v1085, %v1333
        %v1335 = vpop.f32.mrb[0].mxu0
        %v1336 = vadd.f32 %v1089, %v1335
        %1337 = vmatprep.mubr.f32.mxu0 0.0
        %1338 = vmatmul.mubr.f32.gmra.mrb[0].mxu0 %v963
        %v1339 = vpop.f32.mrb[0].mxu0
        %v1340 = vadd.f32 %v1085, %v1339
        %v1341 = vpop.f32.mrb[0].mxu0
        %v1342 = vadd.f32 %v1089, %v1341
        %1343 = vmatprep.mubr.f32.mxu0 0.0
        %1344 = vmatmul.mubr.f32.gmra.mrb[0].mxu0 %v964
        %v1345 = vpop.f32.mrb[0].mxu0
        %v1346 = vadd.f32 %v1085, %v1345
        %v1347 = vpop.f32.mrb[0].mxu0
        %v1348 = vadd.f32 %v1089, %v1347
        %1349 = vmatprep.mubr.f32.mxu0 0.0
        %1350 = vmatmul.mubr.f32.gmra.mrb[0].mxu0 %v965
        %v1351 = vpop.f32.mrb[0].mxu0
        %v1352 = vadd.f32 %v1085, %v1351
        %v1353 = vpop.f32.mrb[0].mxu0
        %v1354 = vadd.f32 %v1089, %v1353
        %1355 = vmatprep.mubr.f32.mxu0 0.0
        %1356 = vmatmul.mubr.f32.gmra.mrb[0].mxu0 %v966
        %v1357 = vpop.f32.mrb[0].mxu0
        %v1358 = vadd.f32 %v1085, %v1357
        %v1359 = vpop.f32.mrb[0].mxu0
        %v1360 = vadd.f32 %v1089, %v1359
        %1361 = vmatprep.mubr.f32.mxu0 0.0
        %1362 = vmatmul.mubr.f32.gmra.mrb[0].mxu0 %v967
        %v1363 = vpop.f32.mrb[0].mxu0
        %v1364 = vadd.f32 %v1085, %v1363
        %v1365 = vpop.f32.mrb[0].mxu0
        %v1366 = vadd.f32 %v1089, %v1365
        %1367 = vmatprep.mubr.f32.mxu0 0.0
        %1368 = vmatmul.mubr.f32.gmra.mrb[0].mxu0 %v968
        %v1369 = vpop.f32.mrb[0].mxu0
        %v1370 = vadd.f32 %v1085, %v1369
        %v1371 = vpop.f32.mrb[0].mxu0
        %v1372 = vadd.f32 %v1089, %v1371
        %1373 = vmatprep.mubr.f32.mxu0 0.0
        %1374 = vmatmul.mubr.f32.gmra.mrb[0].mxu0 %v969
        %v1375 = vpop.f32.mrb[0].mxu0
        %v1376 = vadd.f32 %v1085, %v1375
        %v1377 = vpop.f32.mrb[0].mxu0
        %v1378 = vadd.f32 %v1089, %v1377
        %1379 = vmatprep.mubr.f32.mxu0 0.0
        %1380 = vmatmul.mubr.f32.gmra.mrb[0].mxu0 %v970
        %v1381 = vpop.f32.mrb[0].mxu0
        %v1382 = vadd.f32 %v1085, %v1381
        %v1383 = vpop.f32.mrb[0].mxu0
        %v1384 = vadd.f32 %v1089, %v1383
        %1385 = vmatprep.mubr.f32.mxu0 0.0
        %1386 = vmatmul.mubr.f32.gmra.mrb[0].mxu0 %v971
        %v1387 = vpop.f32.mrb[0].mxu0
        %v1388 = vadd.f32 %v1085, %v1387
        %v1389 = vpop.f32.mrb[0].mxu0
        %v1390 = vadd.f32 %v1089, %v1389
        %1391 = vmatprep.mubr.f32.mxu0 0.0
        %1392 = vmatmul.mubr.f32.gmra.mrb[0].mxu0 %v972
        %v1393 = vpop.f32.mrb[0].mxu0
        %v1394 = vadd.f32 %v1085, %v1393
        %v1395 = vpop.f32.mrb[0].mxu0
        %v1396 = vadd.f32 %v1089, %v1395
        %1397 = vmatprep.mubr.f32.mxu0 0.0
        %1398 = vmatmul.mubr.f32.gmra.mrb[0].mxu0 %v973
        %v1399 = vpop.f32.mrb[0].mxu0
        %v1400 = vadd.f32 %v1085, %v1399
        %v1401 = vpop.f32.mrb[0].mxu0
        %v1402 = vadd.f32 %v1089, %v1401
        %1403 = vmatprep.mubr.f32.mxu0 0.0
        %1404 = vmatmul.mubr.f32.gmra.mrb[0].mxu0 %v974
        %v1405 = vpop.f32.mrb[0].mxu0
        %v1406 = vadd.f32 %v1085, %v1405
        %v1407 = vpop.f32.mrb[0].mxu0
        %v1408 = vadd.f32 %v1089, %v1407
        %1409 = vmatprep.mubr.f32.mxu0 0.0
        %1410 = vmatmul.mubr.f32.gmra.mrb[0].mxu0 %v975
        %v1411 = vpop.f32.mrb[0].mxu0
        %v1412 = vadd.f32 %v1085, %v1411
        %v1413 = vpop.f32.mrb[0].mxu0
        %v1414 = vadd.f32 %v1089, %v1413
        %1415 = vdwg.mxu0
        %v1416 = vmax.f32 %v1161, %v1163
        %v1417 = vmax.f32 %v1167, %v1169
        %v1418 = vmax.f32 %v1173, %v1175
        %v1419 = vmax.f32 %v1179, %v1181
        %v1420 = vmax.f32 %v1185, %v1187
        %v1421 = vmax.f32 %v1191, %v1193
        %v1422 = vmax.f32 %v1197, %v1199
        %v1423 = vmax.f32 %v1203, %v1205
        %v1424 = vmax.f32 %v1209, %v1211
        %v1425 = vmax.f32 %v1215, %v1217
        %v1426 = vmax.f32 %v1221, %v1223
        %v1427 = vmax.f32 %v1227, %v1229
        %v1428 = vmax.f32 %v1233, %v1235
        %v1429 = vmax.f32 %v1239, %v1241
        %v1430 = vmax.f32 %v1245, %v1247
        %v1431 = vmax.f32 %v1251, %v1253
        %v1432 = vmax.f32 %v1322, %v1324
        %v1433 = vmax.f32 %v1328, %v1330
        %v1434 = vmax.f32 %v1334, %v1336
        %v1435 = vmax.f32 %v1340, %v1342
        %v1436 = vmax.f32 %v1346, %v1348
        %v1437 = vmax.f32 %v1352, %v1354
        %v1438 = vmax.f32 %v1358, %v1360
        %v1439 = vmax.f32 %v1364, %v1366
        %v1440 = vmax.f32 %v1370, %v1372
        %v1441 = vmax.f32 %v1376, %v1378
        %v1442 = vmax.f32 %v1382, %v1384
        %v1443 = vmax.f32 %v1388, %v1390
        %v1444 = vmax.f32 %v1394, %v1396
        %v1445 = vmax.f32 %v1400, %v1402
        %v1446 = vmax.f32 %v1406, %v1408
        %v1447 = vmax.f32 %v1412, %v1414
        %v1448 = vmax.f32 %v1416, %v1432
        %v1449 = vmax.f32 %v1417, %v1433
        %v1450 = vmax.f32 %v1418, %v1434
        %v1451 = vmax.f32 %v1419, %v1435
        %v1452 = vmax.f32 %v1420, %v1436
        %v1453 = vmax.f32 %v1421, %v1437
        %v1454 = vmax.f32 %v1422, %v1438
        %v1455 = vmax.f32 %v1423, %v1439
        %v1456 = vmax.f32 %v1424, %v1440
        %v1457 = vmax.f32 %v1425, %v1441
        %v1458 = vmax.f32 %v1426, %v1442
        %v1459 = vmax.f32 %v1427, %v1443
        %v1460 = vmax.f32 %v1428, %v1444
        %v1461 = vmax.f32 %v1429, %v1445
        %v1462 = vmax.f32 %v1430, %v1446
        %v1463 = vmax.f32 %v1431, %v1447
        %v1464 = vmax.f32 %v1448, 0.0
        %v1465 = vmax.f32 %v1449, 0.0
        %v1466 = vmax.f32 %v1450, 0.0
        %v1467 = vmax.f32 %v1451, 0.0
        %v1468 = vmax.f32 %v1452, 0.0
        %v1469 = vmax.f32 %v1453, 0.0
        %v1470 = vmax.f32 %v1454, 0.0
        %v1471 = vmax.f32 %v1455, 0.0
        %v1472 = vmax.f32 %v1456, 0.0
        %v1473 = vmax.f32 %v1457, 0.0
        %v1474 = vmax.f32 %v1458, 0.0
        %v1475 = vmax.f32 %v1459, 0.0
        %v1476 = vmax.f32 %v1460, 0.0
        %v1477 = vmax.f32 %v1461, 0.0
        %v1478 = vmax.f32 %v1462, 0.0
        %v1479 = vmax.f32 %v1463, 0.0
        %v1480 = vld [vmem:[#allocation8] sm:$0xf]
        %v1481 = vld [vmem:[#allocation8 + $0x4] sm:$0xf]
        %v1482 = vld [vmem:[#allocation8 + $0x8] sm:$0xf]
        %v1483 = vld [vmem:[#allocation8 + $0xc] sm:$0xf]
        %v1484 = vld [vmem:[#allocation8 + $0x10] sm:$0xf]
        %v1485 = vld [vmem:[#allocation8 + $0x14] sm:$0xf]
        %v1486 = vld [vmem:[#allocation8 + $0x18] sm:$0xf]
        %v1487 = vld [vmem:[#allocation8 + $0x1c] sm:$0xf]
        %v1488 = vld [vmem:[#allocation8 + $0x20] sm:$0xf]
        %v1489 = vld [vmem:[#allocation8 + $0x24] sm:$0xf]
        %v1490 = vld [vmem:[#allocation8 + $0x28] sm:$0xf]
        %v1491 = vld [vmem:[#allocation8 + $0x2c] sm:$0xf]
        %v1492 = vld [vmem:[#allocation8 + $0x30] sm:$0xf]
        %v1493 = vld [vmem:[#allocation8 + $0x34] sm:$0xf]
        %v1494 = vld [vmem:[#allocation8 + $0x38] sm:$0xf]
        %v1495 = vld [vmem:[#allocation8 + $0x3c] sm:$0xf]
        %v1496 = vunpack.c.l.bf16 %v1480
        %v1497 = vunpack.c.l.bf16 %v1481
        %v1498 = vunpack.c.l.bf16 %v1482
        %v1499 = vunpack.c.l.bf16 %v1483
        %v1500 = vunpack.c.l.bf16 %v1484
        %v1501 = vunpack.c.l.bf16 %v1485
        %v1502 = vunpack.c.l.bf16 %v1486
        %v1503 = vunpack.c.l.bf16 %v1487
        %v1504 = vunpack.c.l.bf16 %v1488
        %v1505 = vunpack.c.l.bf16 %v1489
        %v1506 = vunpack.c.l.bf16 %v1490
        %v1507 = vunpack.c.l.bf16 %v1491
        %v1508 = vunpack.c.l.bf16 %v1492
        %v1509 = vunpack.c.l.bf16 %v1493
        %v1510 = vunpack.c.l.bf16 %v1494
        %v1511 = vunpack.c.l.bf16 %v1495
        %v1512 = vld [vmem:[%s6] sm:$0x1]
        %v1514 = vlaneseq
        %v1515 = vshrl.u32 %v1514, 7
        %v1516 = vsub.s32 0, %v1515
        %v1517 = vrot.slane %v1512, %v1516
        %1519 = vmatprep.subr.mxu0 0.0
        %1520 = vmatpush1.msra.mxu0 %v1496
        %1521 = vmatprep.subr.mxu0 0.0
        %1522 = vmatpush1.msra.mxu0 %v1497
        %1523 = vmatprep.subr.mxu0 0.0
        %1524 = vmatpush1.msra.mxu0 %v1498
        %1525 = vmatprep.subr.mxu0 0.0
        %1526 = vmatpush1.msra.mxu0 %v1499
        %1527 = vmatprep.subr.mxu0 0.0
        %1528 = vmatpush1.msra.mxu0 %v1500
        %1529 = vmatprep.subr.mxu0 0.0
        %1530 = vmatpush1.msra.mxu0 %v1501
        %1531 = vmatprep.subr.mxu0 0.0
        %1532 = vmatpush1.msra.mxu0 %v1502
        %1533 = vmatprep.subr.mxu0 0.0
        %1534 = vmatpush1.msra.mxu0 %v1503
        %1535 = vmatprep.subr.mxu0 0.0
        %1536 = vmatpush1.msra.mxu0 %v1504
        %1537 = vmatprep.subr.mxu0 0.0
        %1538 = vmatpush1.msra.mxu0 %v1505
        %1539 = vmatprep.subr.mxu0 0.0
        %1540 = vmatpush1.msra.mxu0 %v1506
        %1541 = vmatprep.subr.mxu0 0.0
        %1542 = vmatpush1.msra.mxu0 %v1507
        %1543 = vmatprep.subr.mxu0 0.0
        %1544 = vmatpush1.msra.mxu0 %v1508
        %1545 = vmatprep.subr.mxu0 0.0
        %1546 = vmatpush1.msra.mxu0 %v1509
        %1547 = vmatprep.subr.mxu0 0.0
        %1548 = vmatpush1.msra.mxu0 %v1510
        %1549 = vmatprep.subr.mxu0 0.0
        %1550 = vmatpush1.msra.mxu0 %v1511
        %1551 = vmatprep.subr.mxu0 0.0
        %1552 = vmatpush1.msra.mxu0 0.0
        %1553 = vmatprep.subr.mxu0 0.0
        %1554 = vmatpush1.msra.mxu0 0.0
        %1555 = vmatprep.subr.mxu0 0.0
        %1556 = vmatpush1.msra.mxu0 0.0
        %1557 = vmatprep.subr.mxu0 0.0
        %1558 = vmatpush1.msra.mxu0 0.0
        %1559 = vmatprep.subr.mxu0 0.0
        %1560 = vmatpush1.msra.mxu0 0.0
        %1561 = vmatprep.subr.mxu0 0.0
        %1562 = vmatpush1.msra.mxu0 0.0
        %1563 = vmatprep.subr.mxu0 0.0
        %1564 = vmatpush1.msra.mxu0 0.0
        %1565 = vmatprep.subr.mxu0 0.0
        %1566 = vmatpush1.msra.mxu0 0.0
        %1567 = vmatprep.subr.mxu0 0.0
        %1568 = vmatpush1.msra.mxu0 0.0
        %1569 = vmatprep.subr.mxu0 0.0
        %1570 = vmatpush1.msra.mxu0 0.0
        %1571 = vmatprep.subr.mxu0 0.0
        %1572 = vmatpush1.msra.mxu0 0.0
        %1573 = vmatprep.subr.mxu0 0.0
        %1574 = vmatpush1.msra.mxu0 0.0
        %1575 = vmatprep.subr.mxu0 0.0
        %1576 = vmatpush1.msra.mxu0 0.0
        %1577 = vmatprep.subr.mxu0 0.0
        %1578 = vmatpush1.msra.mxu0 0.0
        %1579 = vmatprep.subr.mxu0 0.0
        %1580 = vmatpush1.msra.mxu0 0.0
        %1581 = vmatprep.subr.mxu0 0.0
        %1582 = vmatpush1.msra.mxu0 0.0
        %1583 = vmatprep.mubr.f32.mxu0 0.0
        %1584 = vmatmul.mubr.f32.gmra.mrb[0].mxu0 %v1464
        %v1585 = vpop.f32.mrb[0].mxu0
        %v1586 = vadd.f32 %v1517, %v1585
        %v1587 = vpop.f32.mrb[0].mxu0
        %1588 = vmatprep.mubr.f32.mxu0 0.0
        %1589 = vmatmul.mubr.f32.gmra.mrb[0].mxu0 %v1465
        %v1590 = vpop.f32.mrb[0].mxu0
        %v1591 = vadd.f32 %v1517, %v1590
        %v1592 = vpop.f32.mrb[0].mxu0
        %1593 = vmatprep.mubr.f32.mxu0 0.0
        %1594 = vmatmul.mubr.f32.gmra.mrb[0].mxu0 %v1466
        %v1595 = vpop.f32.mrb[0].mxu0
        %v1596 = vadd.f32 %v1517, %v1595
        %v1597 = vpop.f32.mrb[0].mxu0
        %1598 = vmatprep.mubr.f32.mxu0 0.0
        %1599 = vmatmul.mubr.f32.gmra.mrb[0].mxu0 %v1467
        %v1600 = vpop.f32.mrb[0].mxu0
        %v1601 = vadd.f32 %v1517, %v1600
        %v1602 = vpop.f32.mrb[0].mxu0
        %1603 = vmatprep.mubr.f32.mxu0 0.0
        %1604 = vmatmul.mubr.f32.gmra.mrb[0].mxu0 %v1468
        %v1605 = vpop.f32.mrb[0].mxu0
        %v1606 = vadd.f32 %v1517, %v1605
        %v1607 = vpop.f32.mrb[0].mxu0
        %1608 = vmatprep.mubr.f32.mxu0 0.0
        %1609 = vmatmul.mubr.f32.gmra.mrb[0].mxu0 %v1469
        %v1610 = vpop.f32.mrb[0].mxu0
        %v1611 = vadd.f32 %v1517, %v1610
        %v1612 = vpop.f32.mrb[0].mxu0
        %1613 = vmatprep.mubr.f32.mxu0 0.0
        %1614 = vmatmul.mubr.f32.gmra.mrb[0].mxu0 %v1470
        %v1615 = vpop.f32.mrb[0].mxu0
        %v1616 = vadd.f32 %v1517, %v1615
        %v1617 = vpop.f32.mrb[0].mxu0
        %1618 = vmatprep.mubr.f32.mxu0 0.0
        %1619 = vmatmul.mubr.f32.gmra.mrb[0].mxu0 %v1471
        %v1620 = vpop.f32.mrb[0].mxu0
        %v1621 = vadd.f32 %v1517, %v1620
        %v1622 = vpop.f32.mrb[0].mxu0
        %1623 = vmatprep.mubr.f32.mxu0 0.0
        %1624 = vmatmul.mubr.f32.gmra.mrb[0].mxu0 %v1472
        %v1625 = vpop.f32.mrb[0].mxu0
        %v1626 = vadd.f32 %v1517, %v1625
        %v1627 = vpop.f32.mrb[0].mxu0
        %1628 = vmatprep.mubr.f32.mxu0 0.0
        %1629 = vmatmul.mubr.f32.gmra.mrb[0].mxu0 %v1473
        %v1630 = vpop.f32.mrb[0].mxu0
        %v1631 = vadd.f32 %v1517, %v1630
        %v1632 = vpop.f32.mrb[0].mxu0
        %1633 = vmatprep.mubr.f32.mxu0 0.0
        %1634 = vmatmul.mubr.f32.gmra.mrb[0].mxu0 %v1474
        %v1635 = vpop.f32.mrb[0].mxu0
        %v1636 = vadd.f32 %v1517, %v1635
        %v1637 = vpop.f32.mrb[0].mxu0
        %1638 = vmatprep.mubr.f32.mxu0 0.0
        %1639 = vmatmul.mubr.f32.gmra.mrb[0].mxu0 %v1475
        %v1640 = vpop.f32.mrb[0].mxu0
        %v1641 = vadd.f32 %v1517, %v1640
        %v1642 = vpop.f32.mrb[0].mxu0
        %1643 = vmatprep.mubr.f32.mxu0 0.0
        %1644 = vmatmul.mubr.f32.gmra.mrb[0].mxu0 %v1476
        %v1645 = vpop.f32.mrb[0].mxu0
        %v1646 = vadd.f32 %v1517, %v1645
        %v1647 = vpop.f32.mrb[0].mxu0
        %1648 = vmatprep.mubr.f32.mxu0 0.0
        %1649 = vmatmul.mubr.f32.gmra.mrb[0].mxu0 %v1477
        %v1650 = vpop.f32.mrb[0].mxu0
        %v1651 = vadd.f32 %v1517, %v1650
        %v1652 = vpop.f32.mrb[0].mxu0
        %1653 = vmatprep.mubr.f32.mxu0 0.0
        %1654 = vmatmul.mubr.f32.gmra.mrb[0].mxu0 %v1478
        %v1655 = vpop.f32.mrb[0].mxu0
        %v1656 = vadd.f32 %v1517, %v1655
        %v1657 = vpop.f32.mrb[0].mxu0
        %1658 = vmatprep.mubr.f32.mxu0 0.0
        %1659 = vmatmul.mubr.f32.gmra.mrb[0].mxu0 %v1479
        %v1660 = vpop.f32.mrb[0].mxu0
        %v1661 = vadd.f32 %v1517, %v1660
        %v1662 = vpop.f32.mrb[0].mxu0
        %1663 = vdwg.mxu0
        %1664 = vst [vmem:[%s341] sm:$0xff] %v1586
        %1665 = vst [vmem:[%s341 + $0x8] sm:$0xff] %v1591
        %1666 = vst [vmem:[%s341 + $0x10] sm:$0xff] %v1596
        %1667 = vst [vmem:[%s341 + $0x18] sm:$0xff] %v1601
        %1668 = vst [vmem:[%s341 + $0x20] sm:$0xff] %v1606
        %1669 = vst [vmem:[%s341 + $0x28] sm:$0xff] %v1611
        %1670 = vst [vmem:[%s341 + $0x30] sm:$0xff] %v1616
        %1671 = vst [vmem:[%s341 + $0x38] sm:$0xff] %v1621
        %1672 = vst [vmem:[%s341 + $0x40] sm:$0xff] %v1626
        %1673 = vst [vmem:[%s341 + $0x48] sm:$0xff] %v1631
        %1674 = vst [vmem:[%s341 + $0x50] sm:$0xff] %v1636
        %1675 = vst [vmem:[%s341 + $0x58] sm:$0xff] %v1641
        %1676 = vst [vmem:[%s341 + $0x60] sm:$0xff] %v1646
        %1677 = vst [vmem:[%s341 + $0x68] sm:$0xff] %v1651
        %1678 = vst [vmem:[%s341 + $0x70] sm:$0xff] %v1656
        %1679 = vst [vmem:[%s341 + $0x78] sm:$0xff] %v1661
        %s1680 = sand.u32 %s186, 1
        %s1681 = scalar_lea.sflag [#allocation4], %s1680
        %s1682 = sand.u32 %s186, 1
        %s1683 = smul.addr %s1682, 128
        %s1684 = scalar_lea.vmem [#allocation10], %s1683
        // Predicated region
        $region65: #{tpu_custom_call.1} parent=47 // pred_check
          %p1685 = pneg %p196
        $region66: #{tpu_custom_call.1} parent=47 // pred_check_branch
          %1687 = sbr.rel (%p1685) target = $region68
        $region67: #{tpu_custom_call.1} parent=47 // pred_region
          %s1688 = smul.u32 16, %s26
          %s1690 = ssub.s32 2048, 2048
          %1691 = vsyncadd %s1681, %s1690
          %s1692 = smul.addr %s1688, 128
          %s1693 = scalar_lea.hbm %s7, %s1692
          %s1694 = sshll.u32 %s1684, 4
          %s1695 = int_to_ptr.vmem [resolvable:$true] %s1694
          %1700 = dma.vmem_to_hbm [thread:$0]  %s1695, 2048, %s1693, %s1681, 128, 128, 8
        $region68: #{tpu_custom_call.1} parent=47 // pred_fallthru
          _
      $region48: #{tpu_custom_call.1} parent=5 // pred_fallthru
        _
      %p1701 = scmp.le.s32.totalorder 2, %s21
      // Predicated region
      $region69: #{tpu_custom_call.1} parent=5 // pred_check
        %p1702 = pneg %p1701
      $region70: #{tpu_custom_call.1} parent=5 // pred_check_branch
        %1704 = sbr.rel (%p1702) target = $region72
      $region71: #{tpu_custom_call.1} parent=5 // pred_region
        %s1705 = ssub.s32 %s21, 2
        // Predicated region
        $region73: #{tpu_custom_call.1} parent=71 // pred_check
          %p1706 = pneg %p202
        $region74: #{tpu_custom_call.1} parent=71 // pred_check_branch
          %1708 = sbr.rel (%p1706) target = $region76
        $region75: #{tpu_custom_call.1} parent=71 // pred_region
          %s1709 = sand.u32 %s187, 1
          %s1710 = scalar_lea.sflag [#allocation4], %s1709
          %s1711 = sand.u32 %s187, 1
          %s1712 = smul.addr %s1711, 128
          %s1713 = scalar_lea.vmem [#allocation10], %s1712
          %1714 = dma.done %s1710, 2048
        $region76: #{tpu_custom_call.1} parent=71 // pred_fallthru
          _
      $region72: #{tpu_custom_call.1} parent=5 // pred_fallthru
        _
    $region6: #{tpu_custom_call.1} parent=1 // loop_footer
      %s25 = sadd.s32 1, %s21
    $region7: #{tpu_custom_call.1} parent=1 // loop_footer_branch
      %20 = sbr.rel target = $region3
    $region8: #{tpu_custom_call.1} parent=1 // loop_exit
      _
    %1715 = vsyncpa [#allocation3], 1
    %s1716 = scalar_lea.sflag [#allocation3], 1
    %1717 = vsyncpa %s1716, 1
    %1718 = vsyncpa [#allocation6], 1
    %1719 = vsyncpa [#allocation9], 1
    %1720 = vsyncpa [#allocation4], 1
    %s1721 = scalar_lea.sflag [#allocation4], 1
    %1722 = vsyncpa %s1721, 1

</llo_original>
